<compile_context>
chip_gen: v6e
topology: v6e:2x2x1
jax: 0.10.0
libtpu: 0.0.40
codegen_flags: <defaults>
</compile_context>

<pallas_src>
import functools

import jax
import jax.numpy as jnp
from jax import lax
from jax.experimental import pallas as pl
from jax.experimental.pallas import tpu as pltpu

GROUPS = 32
EPS = 1e-5


def _unet_output_kernel(x_ref, gamma_ref, beta_ref, gmat_ref, w_ref, b_ref, mask_ref,
                        o_ref, *, H, W, C, Cout):
    HW = H * W
    x = x_ref[0].astype(jnp.float32)                      # (C, HW), HW lane-dense

    # ---------------- GroupNorm(32, C): stats on the MXU, two-pass variance -------------
    ones_col = jnp.ones((HW, 1), jnp.float32)
    sum_c = jnp.dot(x, ones_col, preferred_element_type=jnp.float32)          # (C, 1)
    # gmat already folds the 1/(cpg*HW) group-averaging factor.
    g_mean = jnp.dot(gmat_ref[...], sum_c, preferred_element_type=jnp.float32)  # (C, 1)
    xc = x - g_mean                                                            # (C, HW)
    sq_sum = jnp.dot(xc * xc, ones_col, preferred_element_type=jnp.float32)    # (C, 1)
    g_var = jnp.dot(gmat_ref[...], sq_sum, preferred_element_type=jnp.float32)  # (C, 1)
    inv = lax.rsqrt(g_var + EPS)
    y = xc * (inv * gamma_ref[...]) + beta_ref[...]                            # (C, HW)

    # ---------------- SiLU ----------------
    y = y * jax.nn.sigmoid(y)

    # ---------------- Conv2d 3x3 pad=1: one MXU matmul + shift/mask accumulate ----------
    y_bf = y.astype(jnp.bfloat16)                          # bf16 MXU operand, f32 accum
    taps = jnp.dot(w_ref[...], y_bf, preferred_element_type=jnp.float32)       # (9*Cout, HW)

    acc = jnp.zeros((Cout, HW), jnp.float32)
    for k in range(9):                                     # static unroll over the 9 taps
        dh, dw = k // 3 - 1, k % 3 - 1
        d = dh * W + dw                                    # flat spatial offset
        t = taps[k * Cout:(k + 1) * Cout, :]               # (Cout, HW) tiny slab
        if d != 0:
            t = jnp.roll(t, -d, axis=1)                    # out[i] <- tap[i + d]
            t = t * mask_ref[k:k + 1, :]                   # zero the border/wrap positions
        acc = acc + t
    o_ref[0] = (acc + b_ref[...]).astype(o_ref.dtype)      # (Cout, HW), lane-dense store


def unet_output_layer(x_nchw, gamma, beta, conv_w, conv_b):
    """x_nchw: (N, C, H, W); conv_w: (Cout, Cin, 3, 3) PyTorch OIHW; conv_b: (Cout,)."""
    N, C, H, W = x_nchw.shape
    Cout = conv_w.shape[0]
    assert C % GROUPS == 0
    HW = H * W
    cpg = C // GROUPS

    # NCHW -> (N, C, H*W): contiguous reshape, no transpose / dtype copy in HBM.
    x_flat = x_nchw.reshape(N, C, HW)

    # Group-averaging matrix with 1/(cpg*HW) folded in (serves both mean and variance).
    cid = jnp.arange(C)
    gmat = (cid[:, None] // cpg == cid[None, :] // cpg).astype(jnp.float32) / (cpg * HW)

    gamma_col = gamma.reshape(C, 1).astype(jnp.float32)
    beta_col = beta.reshape(C, 1).astype(jnp.float32)
    b_col = conv_b.reshape(Cout, 1).astype(jnp.float32)

    # Conv weights OIHW -> (kh, kw, co, ci) -> (9*Cout, C), tap-major rows, bf16 for MXU.
    w_cat = jnp.transpose(conv_w, (2, 3, 0, 1)).reshape(9 * Cout, C).astype(jnp.bfloat16)

    # Precomputed border-validity masks for the 9 taps, one (HW,) row each.
    ii = jnp.arange(HW)
    hh, ww = ii // W, ii % W
    mask_rows = []
    for k in range(9):
        dh, dw = k // 3 - 1, k % 3 - 1
        valid = (hh + dh >= 0) & (hh + dh < H) & (ww + dw >= 0) & (ww + dw < W)
        mask_rows.append(valid.astype(jnp.float32))
    tap_masks = jnp.stack(mask_rows, axis=0)               # (9, HW)

    # Explicit VMEM budget (defaults are 16/32 MiB scoped); cap at v7x physical 64 MiB.
    img_bytes = C * HW * jnp.dtype(x_flat.dtype).itemsize
    vmem_limit = int(min(64 * 1024 * 1024, max(16 * 1024 * 1024, 8 * img_bytes)))

    kernel = functools.partial(_unet_output_kernel, H=H, W=W, C=C, Cout=Cout)
    out = pl.pallas_call(
        kernel,
        out_shape=jax.ShapeDtypeStruct((N, Cout, HW), x_nchw.dtype),
        grid=(N,),
        in_specs=[
            pl.BlockSpec((1, C, HW), lambda n: (n, 0, 0)),      # x (one image per step)
            pl.BlockSpec((C, 1), lambda n: (0, 0)),             # gamma
            pl.BlockSpec((C, 1), lambda n: (0, 0)),             # beta
            pl.BlockSpec((C, C), lambda n: (0, 0)),             # group-averaging matrix
            pl.BlockSpec((9 * Cout, C), lambda n: (0, 0)),      # concatenated conv weights
            pl.BlockSpec((Cout, 1), lambda n: (0, 0)),          # conv bias
            pl.BlockSpec((9, HW), lambda n: (0, 0)),            # tap border masks
        ],
        out_specs=pl.BlockSpec((1, Cout, HW), lambda n: (n, 0, 0)),
        compiler_params=pltpu.CompilerParams(
            dimension_semantics=("parallel",),
            vmem_limit_bytes=vmem_limit),
    )(x_flat, gamma_col, beta_col, gmat, w_cat, b_col, tap_masks)

    return out.reshape(N, Cout, H, W)                       # already NCHW: free reshape


def reference_forward(x_nchw, gamma, beta, conv_w, conv_b):
    """Pure-JAX reference matching PyTorch semantics (f32 throughout)."""
    N, C, H, W = x_nchw.shape
    xg = x_nchw.reshape(N, GROUPS, C // GROUPS, H, W)
    mean = xg.mean(axis=(2, 3, 4), keepdims=True)
    var = xg.var(axis=(2, 3, 4), keepdims=True)
    xn = ((xg - mean) / jnp.sqrt(var + EPS)).reshape(N, C, H, W)
    xn = xn * gamma[None, :, None, None] + beta[None, :, None, None]
    xs = xn * jax.nn.sigmoid(xn)
    out = lax.conv_general_dilated(
        xs, conv_w, window_strides=(1, 1), padding="SAME",
        dimension_numbers=("NCHW", "OIHW", "NCHW"),
        precision=lax.Precision.HIGHEST)
    return out + conv_b[None, :, None, None]


if __name__ == "__main__":
    N, C_IN, C_OUT, H, W = 2, 64, 4, 16, 16   # C_IN must be divisible by 32 groups

    key = jax.random.PRNGKey(0)
    kx, kw, kb = jax.random.split(key, 3)
    x = jax.random.normal(kx, (N, C_IN, H, W), dtype=jnp.float32)
    # deterministic synthetic params (PyTorch GroupNorm init: weight=1, bias=0)
    gamma = jnp.ones((C_IN,), jnp.float32)
    beta = jnp.zeros((C_IN,), jnp.float32)
    conv_w = jax.random.normal(kw, (C_OUT, C_IN, 3, 3), jnp.float32) * (1.0 / (C_IN * 9) ** 0.5)
    conv_b = jax.random.normal(kb, (C_OUT,), jnp.float32) * 0.1

    out = jax.block_until_ready(unet_output_layer(x, gamma, beta, conv_w, conv_b))
    ref = jax.block_until_ready(reference_forward(x, gamma, beta, conv_w, conv_b))

    assert out.shape == (N, C_OUT, H, W), out.shape
    # Tolerance accounts for bf16 conv operands (f32 accumulation) vs. the f32 reference.
    assert jnp.allclose(out, ref, atol=2e-2, rtol=2e-2), float(jnp.max(jnp.abs(out - ref)))
    print("KERNEL_OK")
</pallas_src>

<mosaic_0001>
module attributes {stable_mosaic.version = 11 : i64} {
  func.func @_unet_output_kernel(%arg0: i32, %arg1: memref<1x64x256xf32, #tpu.memory_space<vmem>>, %arg2: memref<64x1xf32, #tpu.memory_space<vmem>>, %arg3: memref<64x1xf32, #tpu.memory_space<vmem>>, %arg4: memref<64x64xf32, #tpu.memory_space<vmem>>, %arg5: memref<36x64xbf16, #tpu.memory_space<vmem>>, %arg6: memref<4x1xf32, #tpu.memory_space<vmem>>, %arg7: memref<9x256xf32, #tpu.memory_space<vmem>>, %arg8: memref<1x4x256xf32, #tpu.memory_space<vmem>>) attributes {dimension_semantics = [#tpu.dimension_semantics<parallel>], iteration_bounds = array<i64: 2>, scalar_prefetch = 0 : i64, scratch_operands = 0 : i64, tpu.core_type = #tpu.core_type<tc>, window_params = [{transform_indices = @transform_0, window_bounds = array<i64: 1, 64, 256>}, {pipeline_mode = #tpu.pipeline_mode<synchronous>, transform_indices = @transform_1, window_bounds = array<i64: 64, 1>}, {pipeline_mode = #tpu.pipeline_mode<synchronous>, transform_indices = @transform_2, window_bounds = array<i64: 64, 1>}, {pipeline_mode = #tpu.pipeline_mode<synchronous>, transform_indices = @transform_3, window_bounds = array<i64: 64, 64>}, {pipeline_mode = #tpu.pipeline_mode<synchronous>, transform_indices = @transform_4, window_bounds = array<i64: 36, 64>}, {pipeline_mode = #tpu.pipeline_mode<synchronous>, transform_indices = @transform_5, window_bounds = array<i64: 4, 1>}, {pipeline_mode = #tpu.pipeline_mode<synchronous>, transform_indices = @transform_6, window_bounds = array<i64: 9, 256>}, {transform_indices = @transform_7, window_bounds = array<i64: 1, 4, 256>}]} {
    %c0 = arith.constant 0 : index
    %c0_0 = arith.constant 0 : index
    %c0_1 = arith.constant 0 : index
    %0 = vector.load %arg1[%c0, %c0_0, %c0_1] : memref<1x64x256xf32, #tpu.memory_space<vmem>>, vector<1x64x256xf32>
    %1 = vector.shape_cast %0 : vector<1x64x256xf32> to vector<64x256xf32>
    %cst = arith.constant 1.000000e+00 : f32
    %2 = vector.broadcast %cst : f32 to vector<256x1xf32>
    %cst_2 = arith.constant dense<0.000000e+00> : vector<64x1xf32>
    %3 = tpu.matmul %1, %2, %cst_2 {dimension_numbers = #tpu.dot_dimension_numbers<[1], [0], [0], [1], [0, 0, 1, 1], [], []>} : vector<64x256xf32>, vector<256x1xf32>, vector<64x1xf32> -> vector<64x1xf32>
    %c0_3 = arith.constant 0 : index
    %c0_4 = arith.constant 0 : index
    %4 = vector.load %arg4[%c0_3, %c0_4] : memref<64x64xf32, #tpu.memory_space<vmem>>, vector<64x64xf32>
    %cst_5 = arith.constant dense<0.000000e+00> : vector<64x1xf32>
    %5 = tpu.matmul %4, %3, %cst_5 {dimension_numbers = #tpu.dot_dimension_numbers<[1], [0], [0], [1], [0, 0, 1, 1], [], []>} : vector<64x64xf32>, vector<64x1xf32>, vector<64x1xf32> -> vector<64x1xf32>
    %6 = vector.broadcast %5 : vector<64x1xf32> to vector<64x256xf32>
    %7 = arith.subf %1, %6 : vector<64x256xf32>
    %8 = arith.mulf %7, %7 : vector<64x256xf32>
    %cst_6 = arith.constant dense<0.000000e+00> : vector<64x1xf32>
    %9 = tpu.matmul %8, %2, %cst_6 {dimension_numbers = #tpu.dot_dimension_numbers<[1], [0], [0], [1], [0, 0, 1, 1], [], []>} : vector<64x256xf32>, vector<256x1xf32>, vector<64x1xf32> -> vector<64x1xf32>
    %c0_7 = arith.constant 0 : index
    %c0_8 = arith.constant 0 : index
    %10 = vector.load %arg4[%c0_7, %c0_8] : memref<64x64xf32, #tpu.memory_space<vmem>>, vector<64x64xf32>
    %cst_9 = arith.constant dense<0.000000e+00> : vector<64x1xf32>
    %11 = tpu.matmul %10, %9, %cst_9 {dimension_numbers = #tpu.dot_dimension_numbers<[1], [0], [0], [1], [0, 0, 1, 1], [], []>} : vector<64x64xf32>, vector<64x1xf32>, vector<64x1xf32> -> vector<64x1xf32>
    %cst_10 = arith.constant 9.99999974E-6 : f32
    %12 = vector.broadcast %cst_10 : f32 to vector<64x1xf32>
    %13 = arith.addf %11, %12 : vector<64x1xf32>
    %14 = math.rsqrt %13 : vector<64x1xf32>
    %c0_11 = arith.constant 0 : index
    %c0_12 = arith.constant 0 : index
    %15 = vector.load %arg2[%c0_11, %c0_12] : memref<64x1xf32, #tpu.memory_space<vmem>>, vector<64x1xf32>
    %16 = arith.mulf %14, %15 : vector<64x1xf32>
    %17 = vector.broadcast %16 : vector<64x1xf32> to vector<64x256xf32>
    %18 = arith.mulf %7, %17 : vector<64x256xf32>
    %c0_13 = arith.constant 0 : index
    %c0_14 = arith.constant 0 : index
    %19 = vector.load %arg3[%c0_13, %c0_14] : memref<64x1xf32, #tpu.memory_space<vmem>>, vector<64x1xf32>
    %20 = vector.broadcast %19 : vector<64x1xf32> to vector<64x256xf32>
    %21 = arith.addf %18, %20 : vector<64x256xf32>
    %22 = arith.negf %21 : vector<64x256xf32>
    %23 = math.exp %22 : vector<64x256xf32>
    %cst_15 = arith.constant 1.000000e+00 : f32
    %24 = vector.broadcast %cst_15 : f32 to vector<64x256xf32>
    %25 = arith.addf %24, %23 : vector<64x256xf32>
    %26 = arith.divf %24, %25 : vector<64x256xf32>
    %27 = arith.mulf %21, %26 : vector<64x256xf32>
    %28 = arith.truncf %27 : vector<64x256xf32> to vector<64x256xbf16>
    %c0_16 = arith.constant 0 : index
    %c0_17 = arith.constant 0 : index
    %29 = vector.load %arg5[%c0_16, %c0_17] : memref<36x64xbf16, #tpu.memory_space<vmem>>, vector<36x64xbf16>
    %cst_18 = arith.constant dense<0.000000e+00> : vector<36x256xf32>
    %30 = tpu.matmul %29, %28, %cst_18 {dimension_numbers = #tpu.dot_dimension_numbers<[1], [0], [0], [1], [0, 0, 1, 1], [], []>} : vector<36x64xbf16>, vector<64x256xbf16>, vector<36x256xf32> -> vector<36x256xf32>
    %cst_19 = arith.constant 0.000000e+00 : f32
    %31 = vector.broadcast %cst_19 : f32 to vector<4x256xf32>
    %32 = vector.extract_strided_slice %30 {offsets = [0, 0], sizes = [4, 256], strides = [1, 1]} : vector<36x256xf32> to vector<4x256xf32>
    %33 = vector.extract_strided_slice %32 {offsets = [0, 239], sizes = [4, 17], strides = [1, 1]} : vector<4x256xf32> to vector<4x17xf32>
    %34 = vector.extract_strided_slice %32 {offsets = [0, 0], sizes = [4, 239], strides = [1, 1]} : vector<4x256xf32> to vector<4x239xf32>
    %35 = tpu.concatenate %33, %34 in 1 : vector<4x17xf32>, vector<4x239xf32> -> vector<4x256xf32>
    %c0_20 = arith.constant 0 : index
    %c0_21 = arith.constant 0 : index
    %36 = vector.load %arg7[%c0_20, %c0_21] : memref<9x256xf32, #tpu.memory_space<vmem>>, vector<1x256xf32>
    %37 = vector.broadcast %36 : vector<1x256xf32> to vector<4x256xf32>
    %38 = arith.mulf %35, %37 : vector<4x256xf32>
    %39 = arith.addf %31, %38 : vector<4x256xf32>
    %40 = vector.extract_strided_slice %30 {offsets = [4, 0], sizes = [4, 256], strides = [1, 1]} : vector<36x256xf32> to vector<4x256xf32>
    %41 = vector.extract_strided_slice %40 {offsets = [0, 240], sizes = [4, 16], strides = [1, 1]} : vector<4x256xf32> to vector<4x16xf32>
    %42 = vector.extract_strided_slice %40 {offsets = [0, 0], sizes = [4, 240], strides = [1, 1]} : vector<4x256xf32> to vector<4x240xf32>
    %43 = tpu.concatenate %41, %42 in 1 : vector<4x16xf32>, vector<4x240xf32> -> vector<4x256xf32>
    %c1 = arith.constant 1 : index
    %c0_22 = arith.constant 0 : index
    %44 = vector.load %arg7[%c1, %c0_22] : memref<9x256xf32, #tpu.memory_space<vmem>>, vector<1x256xf32>
    %45 = vector.broadcast %44 : vector<1x256xf32> to vector<4x256xf32>
    %46 = arith.mulf %43, %45 : vector<4x256xf32>
    %47 = arith.addf %39, %46 : vector<4x256xf32>
    %48 = vector.extract_strided_slice %30 {offsets = [8, 0], sizes = [4, 256], strides = [1, 1]} : vector<36x256xf32> to vector<4x256xf32>
    %49 = vector.extract_strided_slice %48 {offsets = [0, 241], sizes = [4, 15], strides = [1, 1]} : vector<4x256xf32> to vector<4x15xf32>
    %50 = vector.extract_strided_slice %48 {offsets = [0, 0], sizes = [4, 241], strides = [1, 1]} : vector<4x256xf32> to vector<4x241xf32>
    %51 = tpu.concatenate %49, %50 in 1 : vector<4x15xf32>, vector<4x241xf32> -> vector<4x256xf32>
    %c2 = arith.constant 2 : index
    %c0_23 = arith.constant 0 : index
    %52 = vector.load %arg7[%c2, %c0_23] : memref<9x256xf32, #tpu.memory_space<vmem>>, vector<1x256xf32>
    %53 = vector.broadcast %52 : vector<1x256xf32> to vector<4x256xf32>
    %54 = arith.mulf %51, %53 : vector<4x256xf32>
    %55 = arith.addf %47, %54 : vector<4x256xf32>
    %56 = vector.extract_strided_slice %30 {offsets = [12, 0], sizes = [4, 256], strides = [1, 1]} : vector<36x256xf32> to vector<4x256xf32>
    %57 = vector.extract_strided_slice %56 {offsets = [0, 255], sizes = [4, 1], strides = [1, 1]} : vector<4x256xf32> to vector<4x1xf32>
    %58 = vector.extract_strided_slice %56 {offsets = [0, 0], sizes = [4, 255], strides = [1, 1]} : vector<4x256xf32> to vector<4x255xf32>
    %59 = tpu.concatenate %57, %58 in 1 : vector<4x1xf32>, vector<4x255xf32> -> vector<4x256xf32>
    %c3 = arith.constant 3 : index
    %c0_24 = arith.constant 0 : index
    %60 = vector.load %arg7[%c3, %c0_24] : memref<9x256xf32, #tpu.memory_space<vmem>>, vector<1x256xf32>
    %61 = vector.broadcast %60 : vector<1x256xf32> to vector<4x256xf32>
    %62 = arith.mulf %59, %61 : vector<4x256xf32>
    %63 = arith.addf %55, %62 : vector<4x256xf32>
    %64 = vector.extract_strided_slice %30 {offsets = [16, 0], sizes = [4, 256], strides = [1, 1]} : vector<36x256xf32> to vector<4x256xf32>
    %65 = arith.addf %63, %64 : vector<4x256xf32>
    %66 = vector.extract_strided_slice %30 {offsets = [20, 0], sizes = [4, 256], strides = [1, 1]} : vector<36x256xf32> to vector<4x256xf32>
    %67 = vector.extract_strided_slice %66 {offsets = [0, 1], sizes = [4, 255], strides = [1, 1]} : vector<4x256xf32> to vector<4x255xf32>
    %68 = vector.extract_strided_slice %66 {offsets = [0, 0], sizes = [4, 1], strides = [1, 1]} : vector<4x256xf32> to vector<4x1xf32>
    %69 = tpu.concatenate %67, %68 in 1 : vector<4x255xf32>, vector<4x1xf32> -> vector<4x256xf32>
    %c5 = arith.constant 5 : index
    %c0_25 = arith.constant 0 : index
    %70 = vector.load %arg7[%c5, %c0_25] : memref<9x256xf32, #tpu.memory_space<vmem>>, vector<1x256xf32>
    %71 = vector.broadcast %70 : vector<1x256xf32> to vector<4x256xf32>
    %72 = arith.mulf %69, %71 : vector<4x256xf32>
    %73 = arith.addf %65, %72 : vector<4x256xf32>
    %74 = vector.extract_strided_slice %30 {offsets = [24, 0], sizes = [4, 256], strides = [1, 1]} : vector<36x256xf32> to vector<4x256xf32>
    %75 = vector.extract_strided_slice %74 {offsets = [0, 15], sizes = [4, 241], strides = [1, 1]} : vector<4x256xf32> to vector<4x241xf32>
    %76 = vector.extract_strided_slice %74 {offsets = [0, 0], sizes = [4, 15], strides = [1, 1]} : vector<4x256xf32> to vector<4x15xf32>
    %77 = tpu.concatenate %75, %76 in 1 : vector<4x241xf32>, vector<4x15xf32> -> vector<4x256xf32>
    %c6 = arith.constant 6 : index
    %c0_26 = arith.constant 0 : index
    %78 = vector.load %arg7[%c6, %c0_26] : memref<9x256xf32, #tpu.memory_space<vmem>>, vector<1x256xf32>
    %79 = vector.broadcast %78 : vector<1x256xf32> to vector<4x256xf32>
    %80 = arith.mulf %77, %79 : vector<4x256xf32>
    %81 = arith.addf %73, %80 : vector<4x256xf32>
    %82 = vector.extract_strided_slice %30 {offsets = [28, 0], sizes = [4, 256], strides = [1, 1]} : vector<36x256xf32> to vector<4x256xf32>
    %83 = vector.extract_strided_slice %82 {offsets = [0, 16], sizes = [4, 240], strides = [1, 1]} : vector<4x256xf32> to vector<4x240xf32>
    %84 = vector.extract_strided_slice %82 {offsets = [0, 0], sizes = [4, 16], strides = [1, 1]} : vector<4x256xf32> to vector<4x16xf32>
    %85 = tpu.concatenate %83, %84 in 1 : vector<4x240xf32>, vector<4x16xf32> -> vector<4x256xf32>
    %c7 = arith.constant 7 : index
    %c0_27 = arith.constant 0 : index
    %86 = vector.load %arg7[%c7, %c0_27] : memref<9x256xf32, #tpu.memory_space<vmem>>, vector<1x256xf32>
    %87 = vector.broadcast %86 : vector<1x256xf32> to vector<4x256xf32>
    %88 = arith.mulf %85, %87 : vector<4x256xf32>
    %89 = arith.addf %81, %88 : vector<4x256xf32>
    %90 = vector.extract_strided_slice %30 {offsets = [32, 0], sizes = [4, 256], strides = [1, 1]} : vector<36x256xf32> to vector<4x256xf32>
    %91 = vector.extract_strided_slice %90 {offsets = [0, 17], sizes = [4, 239], strides = [1, 1]} : vector<4x256xf32> to vector<4x239xf32>
    %92 = vector.extract_strided_slice %90 {offsets = [0, 0], sizes = [4, 17], strides = [1, 1]} : vector<4x256xf32> to vector<4x17xf32>
    %93 = tpu.concatenate %91, %92 in 1 : vector<4x239xf32>, vector<4x17xf32> -> vector<4x256xf32>
    %c8 = arith.constant 8 : index
    %c0_28 = arith.constant 0 : index
    %94 = vector.load %arg7[%c8, %c0_28] : memref<9x256xf32, #tpu.memory_space<vmem>>, vector<1x256xf32>
    %95 = vector.broadcast %94 : vector<1x256xf32> to vector<4x256xf32>
    %96 = arith.mulf %93, %95 : vector<4x256xf32>
    %97 = arith.addf %89, %96 : vector<4x256xf32>
    %c0_29 = arith.constant 0 : index
    %c0_30 = arith.constant 0 : index
    %98 = vector.load %arg6[%c0_29, %c0_30] : memref<4x1xf32, #tpu.memory_space<vmem>>, vector<4x1xf32>
    %99 = vector.broadcast %98 : vector<4x1xf32> to vector<4x256xf32>
    %100 = arith.addf %97, %99 : vector<4x256xf32>
    %c0_31 = arith.constant 0 : index
    %c0_32 = arith.constant 0 : index
    %c0_33 = arith.constant 0 : index
    %101 = vector.load %arg8[%c0_31, %c0_32, %c0_33] : memref<1x4x256xf32, #tpu.memory_space<vmem>>, vector<1x4x256xf32>
    %102 = vector.shape_cast %101 : vector<1x4x256xf32> to vector<4x256xf32>
    %103 = vector.shape_cast %100 : vector<4x256xf32> to vector<1x4x256xf32>
    tpu.vector_store %arg8[%c0_31, %c0_32, %c0_33], %103 {strides = array<i32>} : memref<1x4x256xf32, #tpu.memory_space<vmem>>, vector<1x4x256xf32>,
    return
  }
  func.func @transform_0(%arg0: i32) -> (i32, i32, i32) {
    %c0_i32 = arith.constant 0 : i32
    %c0_i32_0 = arith.constant 0 : i32
    %c0_i32_1 = arith.constant 0 : i32
    return %arg0, %c0_i32, %c0_i32_0 : i32, i32, i32
  }
  func.func @transform_1(%arg0: i32) -> (i32, i32) {
    %c0_i32 = arith.constant 0 : i32
    %c0_i32_0 = arith.constant 0 : i32
    %c0_i32_1 = arith.constant 0 : i32
    return %c0_i32, %c0_i32_0 : i32, i32
  }
  func.func @transform_2(%arg0: i32) -> (i32, i32) {
    %c0_i32 = arith.constant 0 : i32
    %c0_i32_0 = arith.constant 0 : i32
    %c0_i32_1 = arith.constant 0 : i32
    return %c0_i32, %c0_i32_0 : i32, i32
  }
  func.func @transform_3(%arg0: i32) -> (i32, i32) {
    %c0_i32 = arith.constant 0 : i32
    %c0_i32_0 = arith.constant 0 : i32
    %c0_i32_1 = arith.constant 0 : i32
    return %c0_i32, %c0_i32_0 : i32, i32
  }
  func.func @transform_4(%arg0: i32) -> (i32, i32) {
    %c0_i32 = arith.constant 0 : i32
    %c0_i32_0 = arith.constant 0 : i32
    %c0_i32_1 = arith.constant 0 : i32
    return %c0_i32, %c0_i32_0 : i32, i32
  }
  func.func @transform_5(%arg0: i32) -> (i32, i32) {
    %c0_i32 = arith.constant 0 : i32
    %c0_i32_0 = arith.constant 0 : i32
    %c0_i32_1 = arith.constant 0 : i32
    return %c0_i32, %c0_i32_0 : i32, i32
  }
  func.func @transform_6(%arg0: i32) -> (i32, i32) {
    %c0_i32 = arith.constant 0 : i32
    %c0_i32_0 = arith.constant 0 : i32
    %c0_i32_1 = arith.constant 0 : i32
    return %c0_i32, %c0_i32_0 : i32, i32
  }
  func.func @transform_7(%arg0: i32) -> (i32, i32, i32) {
    %c0_i32 = arith.constant 0 : i32
    %c0_i32_0 = arith.constant 0 : i32
    %c0_i32_1 = arith.constant 0 : i32
    return %arg0, %c0_i32, %c0_i32_0 : i32, i32, i32
  }
}

</mosaic_0001>

<llo_original>
// kernel: tpu_custom_call.1
$region0: #{tpu_custom_call.1}
  #allocation0 [shape = 'u32[]', space=smem, size = 0x4, offset = 0x4, fixed_abs, tag = 'smem constant byte address 0x4 - core index']
  #allocation1 [shape = 'u32[144,128]{1,0:T(1,128)}', space=vmem, size = 0x12000, scoped, tag = 'internal scratch']
  %s0 = inlined_call_operand.hbm [shape: f32[2,64,256], index: 0, kind: input, shape index: {}]
  %s1 = inlined_call_operand.vmem [shape: f32[64,1], index: 1, kind: input, shape index: {}]
  %s2 = inlined_call_operand.vmem [shape: f32[64,1], index: 2, kind: input, shape index: {}]
  %s3 = inlined_call_operand.vmem [shape: f32[64,64], index: 3, kind: input, shape index: {}]
  %s4 = inlined_call_operand.vmem [shape: bf16[36,64], index: 4, kind: input, shape index: {}]
  %s5 = inlined_call_operand.vmem [shape: f32[4,1], index: 5, kind: input, shape index: {}]
  %s6 = inlined_call_operand.vmem [shape: f32[9,256], index: 6, kind: input, shape index: {}]
  %s7 = inlined_call_operand.hbm [shape: f32[2,4,256], index: 7, kind: output, shape index: {}]
  %s8 = sld [smem:[#allocation0]]
  $region65: #{tpu_custom_call.1} parent=0
    _
  %s10 = ssub.s32 1, %s8
  %s11 = scalar_select 0, %s10, %s8
  $region1: #{tpu_custom_call.1} parent=0
    #allocation2 [shape = 'u8[131072]{0}', space=vmem, size = 0x20000, scoped, tag = 'input window, operand 0']
    #allocation3 [shape = 's32[2]{0}', space=sflag, size = 0x8, scoped, tag = 'scoped memory for tpu_custom_call.1']
    #allocation4 [shape = 's32[2]{0}', space=sflag, size = 0x8, scoped, tag = 'scoped memory for tpu_custom_call.1']
    #allocation5 [shape = 'u8[8192]{0}', space=vmem, size = 0x2000, scoped, tag = 'output window, operand 0']
    %12 = vsyncpa [#allocation3], 0
    %s13 = scalar_lea.sflag [#allocation3], 1
    %14 = vsyncpa %s13, 0
    %15 = vsyncpa [#allocation4], 0
    %s16 = scalar_lea.sflag [#allocation4], 1
    %17 = vsyncpa %s16, 0
    loop: start=0, step=1, limit=4
    $region2: #{tpu_custom_call.1} parent=1 // loop_pre_header
      _
    $region3: #{tpu_custom_call.1} parent=1 // loop_header
      %s19 = sphi 0, %s23
      %p20 = scmp.ge.s32.totalorder %s19, 4
      %s29 = sphi 0, %s31
      %s32 = sphi 0, %s29
      %s33 = sphi 0, %s32
      %s49 = sphi 0, %s33
      %s53 = sphi 0, %s53
      %s55 = sphi 0, %s53
      %s56 = sphi 0, %s55
      %s70 = sphi 0, %s56
      %s74 = sphi 0, %s74
      %s76 = sphi 0, %s74
      %s77 = sphi 0, %s76
      %s91 = sphi 0, %s77
      %s95 = sphi 0, %s95
      %s97 = sphi 0, %s95
      %s98 = sphi 0, %s97
      %s112 = sphi 0, %s98
      %s116 = sphi 0, %s116
      %s118 = sphi 0, %s116
      %s119 = sphi 0, %s118
      %s133 = sphi 0, %s119
      %s137 = sphi 0, %s137
      %s139 = sphi 0, %s137
      %s140 = sphi 0, %s139
      %s154 = sphi 0, %s140
      %s158 = sphi 0, %s158
      %s160 = sphi 0, %s158
      %s161 = sphi 0, %s160
      %s175 = sphi 0, %s161
      %s181 = sphi 0, %s183
      %s184 = sphi 0, %s181
      %s185 = sphi 0, %s184
      %s201 = sphi 0, %s185
    $region4: #{tpu_custom_call.1} parent=1 // loop_header_branch
      %22 = sbr.rel (%p20) target = $region8
    $region5: #{tpu_custom_call.1} parent=1 // loop_body
      %s24 = ssub.s32 %s19, 1
      %s25 = ssub.s32 %s19, 2
      %s26 = sadd.s32 %s19, 1
      %s27 = ssub.s32 %s19, %s26
      %p28 = scmp.eq.s32.totalorder %s27, 0
      %s30 = sadd.s32 %s29, 1
      %s31 = scalar_select %p28, %s29, %s30
      %p34 = pneg %p28
      %p35 = scmp.eq.s32.totalorder %s19, 1
      %p36 = por %p34, %p35
      %p37 = scmp.ne.s32.totalorder %s29, %s32
      %p38 = scmp.eq.s32.totalorder %s19, 0
      %p39 = por %p37, %p38
      %p40 = scmp.ne.s32.totalorder %s29, %s32
      %p41 = scmp.eq.s32.totalorder %s24, 1
      %p42 = por %p40, %p41
      %p43 = scmp.ne.s32.totalorder %s32, %s33
      %p44 = scmp.eq.s32.totalorder %s24, 0
      %p45 = por %p43, %p44
      %p46 = scmp.ne.s32.totalorder %s32, %s33
      %p47 = scmp.eq.s32.totalorder %s25, 1
      %p48 = por %p46, %p47
      %p50 = scmp.ne.s32.totalorder %s33, %s49
      %p51 = scmp.eq.s32.totalorder %s25, 0
      %p52 = por %p50, %p51
      %s54 = sadd.s32 %s53, 1
      %p57 = scmp.eq.s32.totalorder %s19, 1
      %p58 = scmp.ne.s32.totalorder %s53, %s55
      %p59 = scmp.eq.s32.totalorder %s19, 0
      %p60 = por %p58, %p59
      %p61 = scmp.ne.s32.totalorder %s53, %s55
      %p62 = scmp.eq.s32.totalorder %s24, 1
      %p63 = por %p61, %p62
      %p64 = scmp.ne.s32.totalorder %s55, %s56
      %p65 = scmp.eq.s32.totalorder %s24, 0
      %p66 = por %p64, %p65
      %p67 = scmp.ne.s32.totalorder %s55, %s56
      %p68 = scmp.eq.s32.totalorder %s25, 1
      %p69 = por %p67, %p68
      %p71 = scmp.ne.s32.totalorder %s56, %s70
      %p72 = scmp.eq.s32.totalorder %s25, 0
      %p73 = por %p71, %p72
      %s75 = sadd.s32 %s74, 1
      %p78 = scmp.eq.s32.totalorder %s19, 1
      %p79 = scmp.ne.s32.totalorder %s74, %s76
      %p80 = scmp.eq.s32.totalorder %s19, 0
      %p81 = por %p79, %p80
      %p82 = scmp.ne.s32.totalorder %s74, %s76
      %p83 = scmp.eq.s32.totalorder %s24, 1
      %p84 = por %p82, %p83
      %p85 = scmp.ne.s32.totalorder %s76, %s77
      %p86 = scmp.eq.s32.totalorder %s24, 0
      %p87 = por %p85, %p86
      %p88 = scmp.ne.s32.totalorder %s76, %s77
      %p89 = scmp.eq.s32.totalorder %s25, 1
      %p90 = por %p88, %p89
      %p92 = scmp.ne.s32.totalorder %s77, %s91
      %p93 = scmp.eq.s32.totalorder %s25, 0
      %p94 = por %p92, %p93
      %s96 = sadd.s32 %s95, 1
      %p99 = scmp.eq.s32.totalorder %s19, 1
      %p100 = scmp.ne.s32.totalorder %s95, %s97
      %p101 = scmp.eq.s32.totalorder %s19, 0
      %p102 = por %p100, %p101
      %p103 = scmp.ne.s32.totalorder %s95, %s97
      %p104 = scmp.eq.s32.totalorder %s24, 1
      %p105 = por %p103, %p104
      %p106 = scmp.ne.s32.totalorder %s97, %s98
      %p107 = scmp.eq.s32.totalorder %s24, 0
      %p108 = por %p106, %p107
      %p109 = scmp.ne.s32.totalorder %s97, %s98
      %p110 = scmp.eq.s32.totalorder %s25, 1
      %p111 = por %p109, %p110
      %p113 = scmp.ne.s32.totalorder %s98, %s112
      %p114 = scmp.eq.s32.totalorder %s25, 0
      %p115 = por %p113, %p114
      %s117 = sadd.s32 %s116, 1
      %p120 = scmp.eq.s32.totalorder %s19, 1
      %p121 = scmp.ne.s32.totalorder %s116, %s118
      %p122 = scmp.eq.s32.totalorder %s19, 0
      %p123 = por %p121, %p122
      %p124 = scmp.ne.s32.totalorder %s116, %s118
      %p125 = scmp.eq.s32.totalorder %s24, 1
      %p126 = por %p124, %p125
      %p127 = scmp.ne.s32.totalorder %s118, %s119
      %p128 = scmp.eq.s32.totalorder %s24, 0
      %p129 = por %p127, %p128
      %p130 = scmp.ne.s32.totalorder %s118, %s119
      %p131 = scmp.eq.s32.totalorder %s25, 1
      %p132 = por %p130, %p131
      %p134 = scmp.ne.s32.totalorder %s119, %s133
      %p135 = scmp.eq.s32.totalorder %s25, 0
      %p136 = por %p134, %p135
      %s138 = sadd.s32 %s137, 1
      %p141 = scmp.eq.s32.totalorder %s19, 1
      %p142 = scmp.ne.s32.totalorder %s137, %s139
      %p143 = scmp.eq.s32.totalorder %s19, 0
      %p144 = por %p142, %p143
      %p145 = scmp.ne.s32.totalorder %s137, %s139
      %p146 = scmp.eq.s32.totalorder %s24, 1
      %p147 = por %p145, %p146
      %p148 = scmp.ne.s32.totalorder %s139, %s140
      %p149 = scmp.eq.s32.totalorder %s24, 0
      %p150 = por %p148, %p149
      %p151 = scmp.ne.s32.totalorder %s139, %s140
      %p152 = scmp.eq.s32.totalorder %s25, 1
      %p153 = por %p151, %p152
      %p155 = scmp.ne.s32.totalorder %s140, %s154
      %p156 = scmp.eq.s32.totalorder %s25, 0
      %p157 = por %p155, %p156
      %s159 = sadd.s32 %s158, 1
      %p162 = scmp.eq.s32.totalorder %s19, 1
      %p163 = scmp.ne.s32.totalorder %s158, %s160
      %p164 = scmp.eq.s32.totalorder %s19, 0
      %p165 = por %p163, %p164
      %p166 = scmp.ne.s32.totalorder %s158, %s160
      %p167 = scmp.eq.s32.totalorder %s24, 1
      %p168 = por %p166, %p167
      %p169 = scmp.ne.s32.totalorder %s160, %s161
      %p170 = scmp.eq.s32.totalorder %s24, 0
      %p171 = por %p169, %p170
      %p172 = scmp.ne.s32.totalorder %s160, %s161
      %p173 = scmp.eq.s32.totalorder %s25, 1
      %p174 = por %p172, %p173
      %p176 = scmp.ne.s32.totalorder %s161, %s175
      %p177 = scmp.eq.s32.totalorder %s25, 0
      %p178 = por %p176, %p177
      %s179 = ssub.s32 %s19, %s26
      %p180 = scmp.eq.s32.totalorder %s179, 0
      %s182 = sadd.s32 %s181, 1
      %s183 = scalar_select %p180, %s181, %s182
      %p186 = pneg %p180
      %p187 = scmp.eq.s32.totalorder %s19, 1
      %p188 = por %p186, %p187
      %p189 = scmp.ne.s32.totalorder %s181, %s184
      %p190 = scmp.eq.s32.totalorder %s19, 0
      %p191 = por %p189, %p190
      %p192 = scmp.ne.s32.totalorder %s181, %s184
      %p193 = scmp.eq.s32.totalorder %s24, 1
      %p194 = por %p192, %p193
      %p195 = scmp.ne.s32.totalorder %s184, %s185
      %p196 = scmp.eq.s32.totalorder %s24, 0
      %p197 = por %p195, %p196
      %p198 = scmp.ne.s32.totalorder %s184, %s185
      %p199 = scmp.eq.s32.totalorder %s25, 1
      %p200 = por %p198, %p199
      %p202 = scmp.ne.s32.totalorder %s185, %s201
      %p203 = scmp.eq.s32.totalorder %s25, 0
      %p204 = por %p202, %p203
      %p205 = scmp.le.s32.totalorder 1, %s19
      %p206 = scmp.lt.s32.totalorder %s19, 3
      %p207 = pnand %p205, %p206
      %p208 = pneg %p207
      // Predicated region
      $region9: #{tpu_custom_call.1} parent=5 // pred_check
        _
      $region10: #{tpu_custom_call.1} parent=5 // pred_check_branch
        %210 = sbr.rel (%p207) target = $region12
      $region11: #{tpu_custom_call.1} parent=5 // pred_region
        %s211 = ssub.s32 %s19, 1
        // Predicated region
        $region13: #{tpu_custom_call.1} parent=11 // pred_check
          %p212 = pneg %p66
        $region14: #{tpu_custom_call.1} parent=11 // pred_check_branch
          %214 = sbr.rel (%p212) target = $region16
        $region15: #{tpu_custom_call.1} parent=11 // pred_region
          _
        $region16: #{tpu_custom_call.1} parent=11 // pred_fallthru
          _
        // Predicated region
        $region17: #{tpu_custom_call.1} parent=11 // pred_check
          %p215 = pneg %p87
        $region18: #{tpu_custom_call.1} parent=11 // pred_check_branch
          %217 = sbr.rel (%p215) target = $region20
        $region19: #{tpu_custom_call.1} parent=11 // pred_region
          _
        $region20: #{tpu_custom_call.1} parent=11 // pred_fallthru
          _
        // Predicated region
        $region21: #{tpu_custom_call.1} parent=11 // pred_check
          %p218 = pneg %p108
        $region22: #{tpu_custom_call.1} parent=11 // pred_check_branch
          %220 = sbr.rel (%p218) target = $region24
        $region23: #{tpu_custom_call.1} parent=11 // pred_region
          _
        $region24: #{tpu_custom_call.1} parent=11 // pred_fallthru
          _
        // Predicated region
        $region25: #{tpu_custom_call.1} parent=11 // pred_check
          %p221 = pneg %p129
        $region26: #{tpu_custom_call.1} parent=11 // pred_check_branch
          %223 = sbr.rel (%p221) target = $region28
        $region27: #{tpu_custom_call.1} parent=11 // pred_region
          _
        $region28: #{tpu_custom_call.1} parent=11 // pred_fallthru
          _
        // Predicated region
        $region29: #{tpu_custom_call.1} parent=11 // pred_check
          %p224 = pneg %p150
        $region30: #{tpu_custom_call.1} parent=11 // pred_check_branch
          %226 = sbr.rel (%p224) target = $region32
        $region31: #{tpu_custom_call.1} parent=11 // pred_region
          _
        $region32: #{tpu_custom_call.1} parent=11 // pred_fallthru
          _
        // Predicated region
        $region33: #{tpu_custom_call.1} parent=11 // pred_check
          %p227 = pneg %p171
        $region34: #{tpu_custom_call.1} parent=11 // pred_check_branch
          %229 = sbr.rel (%p227) target = $region36
        $region35: #{tpu_custom_call.1} parent=11 // pred_region
          _
        $region36: #{tpu_custom_call.1} parent=11 // pred_fallthru
          _
      $region12: #{tpu_custom_call.1} parent=5 // pred_fallthru
        _
      %p230 = scmp.lt.s32.totalorder %s19, 2
      // Predicated region
      $region37: #{tpu_custom_call.1} parent=5 // pred_check
        %p231 = pneg %p230
      $region38: #{tpu_custom_call.1} parent=5 // pred_check_branch
        %233 = sbr.rel (%p231) target = $region40
      $region39: #{tpu_custom_call.1} parent=5 // pred_region
        // Predicated region
        $region41: #{tpu_custom_call.1} parent=39 // pred_check
          %p234 = pneg %p39
        $region42: #{tpu_custom_call.1} parent=39 // pred_check_branch
          %236 = sbr.rel (%p234) target = $region44
        $region43: #{tpu_custom_call.1} parent=39 // pred_region
          %s237 = sand.u32 %s29, 1
          %s238 = scalar_lea.sflag [#allocation3], %s237
          %s239 = sand.u32 %s29, 1
          %s240 = smul.addr %s239, 128
          %s241 = scalar_lea.vmem [#allocation2], %s240
          %s243 = ssub.s32 2048, 2048
          %244 = vsyncadd %s238, %s243
          %s245 = smul.addr %s19, 16
          %s246 = smul.addr %s245, 128
          %s247 = scalar_lea.hbm %s0, %s246
          %s248 = sshll.u32 %s241, 4
          %s249 = int_to_ptr.vmem [resolvable:$true] %s248
          %254 = dma.hbm_to_vmem [thread:$0]  %s247, 2048, %s249, %s238, 256, 256, 16
        $region44: #{tpu_custom_call.1} parent=39 // pred_fallthru
          _
      $region40: #{tpu_custom_call.1} parent=5 // pred_fallthru
        _
      %p255 = scmp.le.s32.totalorder 1, %s19
      %p256 = scmp.lt.s32.totalorder %s19, 3
      %p257 = pnand %p255, %p256
      %p258 = pneg %p257
      // Predicated region
      $region45: #{tpu_custom_call.1} parent=5 // pred_check
        _
      $region46: #{tpu_custom_call.1} parent=5 // pred_check_branch
        %260 = sbr.rel (%p257) target = $region48
      $region47: #{tpu_custom_call.1} parent=5 // pred_region
        %s261 = ssub.s32 %s19, 1
        %s262 = sand.u32 %s32, 1
        %s263 = scalar_lea.sflag [#allocation3], %s262
        %s264 = sand.u32 %s32, 1
        %s265 = smul.addr %s264, 128
        %s266 = scalar_lea.vmem [#allocation2], %s265
        // Predicated region
        $region49: #{tpu_custom_call.1} parent=47 // pred_check
          %p267 = pneg %p45
        $region50: #{tpu_custom_call.1} parent=47 // pred_check_branch
          %269 = sbr.rel (%p267) target = $region52
        $region51: #{tpu_custom_call.1} parent=47 // pred_region
          %270 = dma.done %s263, 2048
        $region52: #{tpu_custom_call.1} parent=47 // pred_fallthru
          _
        %s271 = sand.u32 %s32, 1
        %s272 = scalar_lea.sflag [#allocation3], %s271
        %s273 = sand.u32 %s32, 1
        %s274 = smul.addr %s273, 128
        %s275 = scalar_lea.vmem [#allocation2], %s274
        %p276 = pneg %p45
        %p277 = pneg %p42
        %p278 = pneg %p66
        %p279 = pneg %p63
        %p280 = pneg %p87
        %p281 = pneg %p84
        %p282 = pneg %p108
        %p283 = pneg %p105
        %p284 = pneg %p129
        %p285 = pneg %p126
        %p286 = pneg %p150
        %p287 = pneg %p147
        %p288 = pneg %p171
        %p289 = pneg %p168
        %p290 = pneg %p197
        %p291 = pneg %p194
        %s292 = sand.u32 %s184, 1
        %s293 = scalar_lea.sflag [#allocation4], %s292
        %s294 = sand.u32 %s184, 1
        %s295 = smul.addr %s294, 8
        %s296 = scalar_lea.vmem [#allocation5], %s295
        %v298 = vld [vmem:[%s266] sm:$0xff]
        %v299 = vld [vmem:[%s266 + $0x8] sm:$0xff]
        %v300 = vld [vmem:[%s266 + $0x10] sm:$0xff]
        %v301 = vld [vmem:[%s266 + $0x18] sm:$0xff]
        %v302 = vld [vmem:[%s266 + $0x20] sm:$0xff]
        %v303 = vld [vmem:[%s266 + $0x28] sm:$0xff]
        %v304 = vld [vmem:[%s266 + $0x30] sm:$0xff]
        %v305 = vld [vmem:[%s266 + $0x38] sm:$0xff]
        %v306 = vld [vmem:[%s266 + $0x40] sm:$0xff]
        %v307 = vld [vmem:[%s266 + $0x48] sm:$0xff]
        %v308 = vld [vmem:[%s266 + $0x50] sm:$0xff]
        %v309 = vld [vmem:[%s266 + $0x58] sm:$0xff]
        %v310 = vld [vmem:[%s266 + $0x60] sm:$0xff]
        %v311 = vld [vmem:[%s266 + $0x68] sm:$0xff]
        %v312 = vld [vmem:[%s266 + $0x70] sm:$0xff]
        %v313 = vld [vmem:[%s266 + $0x78] sm:$0xff]
        %314 = vmatprep.subr.mxu0 0.0
        %315 = vmatpush1.msra.mxu0 1.0
        %316 = vmatprep.subr.mxu0 0.0
        %317 = vmatpush1.msra.mxu0 1.0
        %318 = vmatprep.subr.mxu0 0.0
        %319 = vmatpush1.msra.mxu0 1.0
        %320 = vmatprep.subr.mxu0 0.0
        %321 = vmatpush1.msra.mxu0 1.0
        %322 = vmatprep.subr.mxu0 0.0
        %323 = vmatpush1.msra.mxu0 1.0
        %324 = vmatprep.subr.mxu0 0.0
        %325 = vmatpush1.msra.mxu0 1.0
        %326 = vmatprep.subr.mxu0 0.0
        %327 = vmatpush1.msra.mxu0 1.0
        %328 = vmatprep.subr.mxu0 0.0
        %329 = vmatpush1.msra.mxu0 1.0
        %330 = vmatprep.subr.mxu0 0.0
        %331 = vmatpush1.msra.mxu0 1.0
        %332 = vmatprep.subr.mxu0 0.0
        %333 = vmatpush1.msra.mxu0 1.0
        %334 = vmatprep.subr.mxu0 0.0
        %335 = vmatpush1.msra.mxu0 1.0
        %336 = vmatprep.subr.mxu0 0.0
        %337 = vmatpush1.msra.mxu0 1.0
        %338 = vmatprep.subr.mxu0 0.0
        %339 = vmatpush1.msra.mxu0 1.0
        %340 = vmatprep.subr.mxu0 0.0
        %341 = vmatpush1.msra.mxu0 1.0
        %342 = vmatprep.subr.mxu0 0.0
        %343 = vmatpush1.msra.mxu0 1.0
        %344 = vmatprep.subr.mxu0 0.0
        %345 = vmatpush1.msra.mxu0 1.0
        %346 = vmatprep.subr.mxu0 0.0
        %347 = vmatpush2.msra.mxu0 1.0
        %348 = vmatprep.subr.mxu0 0.0
        %349 = vmatpush2.msra.mxu0 1.0
        %350 = vmatprep.subr.mxu0 0.0
        %351 = vmatpush2.msra.mxu0 1.0
        %352 = vmatprep.subr.mxu0 0.0
        %353 = vmatpush2.msra.mxu0 1.0
        %354 = vmatprep.subr.mxu0 0.0
        %355 = vmatpush2.msra.mxu0 1.0
        %356 = vmatprep.subr.mxu0 0.0
        %357 = vmatpush2.msra.mxu0 1.0
        %358 = vmatprep.subr.mxu0 0.0
        %359 = vmatpush2.msra.mxu0 1.0
        %360 = vmatprep.subr.mxu0 0.0
        %361 = vmatpush2.msra.mxu0 1.0
        %362 = vmatprep.subr.mxu0 0.0
        %363 = vmatpush2.msra.mxu0 1.0
        %364 = vmatprep.subr.mxu0 0.0
        %365 = vmatpush2.msra.mxu0 1.0
        %366 = vmatprep.subr.mxu0 0.0
        %367 = vmatpush2.msra.mxu0 1.0
        %368 = vmatprep.subr.mxu0 0.0
        %369 = vmatpush2.msra.mxu0 1.0
        %370 = vmatprep.subr.mxu0 0.0
        %371 = vmatpush2.msra.mxu0 1.0
        %372 = vmatprep.subr.mxu0 0.0
        %373 = vmatpush2.msra.mxu0 1.0
        %374 = vmatprep.subr.mxu0 0.0
        %375 = vmatpush2.msra.mxu0 1.0
        %376 = vmatprep.subr.mxu0 0.0
        %377 = vmatpush2.msra.mxu0 1.0
        %378 = vmatprep.mubr.f32.mxu0 %v299
        %379 = vmatmul.mubr.f32.gmra.mxu0 %v298
        %v380 = vpop.f32.mrf.mxu0
        %v381 = vadd.f32 0.0, %v380
        %v382 = vpop.f32.mrf.mxu0
        %383 = vmatprep.mubr.f32.mxu0 %v301
        %384 = vmatmul.mubr.f32.gmra.mxu0 %v300
        %v385 = vpop.f32.mrf.mxu0
        %v386 = vadd.f32 0.0, %v385
        %v387 = vpop.f32.mrf.mxu0
        %388 = vmatprep.mubr.f32.mxu0 %v303
        %389 = vmatmul.mubr.f32.gmra.mxu0 %v302
        %v390 = vpop.f32.mrf.mxu0
        %v391 = vadd.f32 0.0, %v390
        %v392 = vpop.f32.mrf.mxu0
        %393 = vmatprep.mubr.f32.mxu0 %v305
        %394 = vmatmul.mubr.f32.gmra.mxu0 %v304
        %v395 = vpop.f32.mrf.mxu0
        %v396 = vadd.f32 0.0, %v395
        %v397 = vpop.f32.mrf.mxu0
        %398 = vmatprep.mubr.f32.mxu0 %v307
        %399 = vmatmul.mubr.f32.gmra.mxu0 %v306
        %v400 = vpop.f32.mrf.mxu0
        %v401 = vadd.f32 0.0, %v400
        %v402 = vpop.f32.mrf.mxu0
        %403 = vmatprep.mubr.f32.mxu0 %v309
        %404 = vmatmul.mubr.f32.gmra.mxu0 %v308
        %v405 = vpop.f32.mrf.mxu0
        %v406 = vadd.f32 0.0, %v405
        %v407 = vpop.f32.mrf.mxu0
        %408 = vmatprep.mubr.f32.mxu0 %v311
        %409 = vmatmul.mubr.f32.gmra.mxu0 %v310
        %v410 = vpop.f32.mrf.mxu0
        %v411 = vadd.f32 0.0, %v410
        %v412 = vpop.f32.mrf.mxu0
        %413 = vmatprep.mubr.f32.mxu0 %v313
        %414 = vmatmul.mubr.f32.gmra.mxu0 %v312
        %v415 = vpop.f32.mrf.mxu0
        %v416 = vadd.f32 0.0, %v415
        %v417 = vpop.f32.mrf.mxu0
        %418 = vdwg.mxu0
        %v419 = vld [vmem:[%s3] sm:$0xff]
        %v420 = vld [vmem:[%s3 + $0x8] sm:$0xff]
        %v421 = vld [vmem:[%s3 + $0x10] sm:$0xff]
        %v422 = vld [vmem:[%s3 + $0x18] sm:$0xff]
        %v423 = vld [vmem:[%s3 + $0x20] sm:$0xff]
        %v424 = vld [vmem:[%s3 + $0x28] sm:$0xff]
        %v425 = vld [vmem:[%s3 + $0x30] sm:$0xff]
        %v426 = vld [vmem:[%s3 + $0x38] sm:$0xff]
        %vm427 = vcmask 523264
        %v429 = vsel %vm427, %v419, 0
        %v432 = vsel %vm427, %v420, 0
        %v435 = vsel %vm427, %v421, 0
        %v438 = vsel %vm427, %v422, 0
        %v441 = vsel %vm427, %v423, 0
        %v444 = vsel %vm427, %v424, 0
        %v447 = vsel %vm427, %v425, 0
        %v450 = vsel %vm427, %v426, 0
        %452 = vmatprep.subr.mxu0 0.0
        %453 = vmatpush1.msra.mxu0 0.0
        %454 = vmatprep.subr.mxu0 0.0
        %455 = vmatpush1.msra.mxu0 0.0
        %456 = vmatprep.subr.mxu0 0.0
        %457 = vmatpush1.msra.mxu0 0.0
        %458 = vmatprep.subr.mxu0 0.0
        %459 = vmatpush1.msra.mxu0 0.0
        %460 = vmatprep.subr.mxu0 0.0
        %461 = vmatpush1.msra.mxu0 0.0
        %462 = vmatprep.subr.mxu0 0.0
        %463 = vmatpush1.msra.mxu0 0.0
        %464 = vmatprep.subr.mxu0 0.0
        %465 = vmatpush1.msra.mxu0 0.0
        %466 = vmatprep.subr.mxu0 0.0
        %467 = vmatpush1.msra.mxu0 0.0
        %468 = vmatprep.subr.mxu0 0.0
        %469 = vmatpush1.msra.mxu0 %v416
        %470 = vmatprep.subr.mxu0 0.0
        %471 = vmatpush1.msra.mxu0 %v411
        %472 = vmatprep.subr.mxu0 0.0
        %473 = vmatpush1.msra.mxu0 %v406
        %474 = vmatprep.subr.mxu0 0.0
        %475 = vmatpush1.msra.mxu0 %v401
        %476 = vmatprep.subr.mxu0 0.0
        %477 = vmatpush1.msra.mxu0 %v396
        %478 = vmatprep.subr.mxu0 0.0
        %479 = vmatpush1.msra.mxu0 %v391
        %480 = vmatprep.subr.mxu0 0.0
        %481 = vmatpush1.msra.mxu0 %v386
        %482 = vmatprep.subr.mxu0 0.0
        %483 = vmatpush1.msra.mxu0 %v381
        %484 = vmatprep.subr.mxu0 0.0
        %485 = vmatpush2.msra.mxu0 0.0
        %486 = vmatprep.subr.mxu0 0.0
        %487 = vmatpush2.msra.mxu0 0.0
        %488 = vmatprep.subr.mxu0 0.0
        %489 = vmatpush2.msra.mxu0 0.0
        %490 = vmatprep.subr.mxu0 0.0
        %491 = vmatpush2.msra.mxu0 0.0
        %492 = vmatprep.subr.mxu0 0.0
        %493 = vmatpush2.msra.mxu0 0.0
        %494 = vmatprep.subr.mxu0 0.0
        %495 = vmatpush2.msra.mxu0 0.0
        %496 = vmatprep.subr.mxu0 0.0
        %497 = vmatpush2.msra.mxu0 0.0
        %498 = vmatprep.subr.mxu0 0.0
        %499 = vmatpush2.msra.mxu0 0.0
        %500 = vmatprep.subr.mxu0 0.0
        %501 = vmatpush2.msra.mxu0 0.0
        %502 = vmatprep.subr.mxu0 0.0
        %503 = vmatpush2.msra.mxu0 0.0
        %504 = vmatprep.subr.mxu0 0.0
        %505 = vmatpush2.msra.mxu0 0.0
        %506 = vmatprep.subr.mxu0 0.0
        %507 = vmatpush2.msra.mxu0 0.0
        %508 = vmatprep.subr.mxu0 0.0
        %509 = vmatpush2.msra.mxu0 0.0
        %510 = vmatprep.subr.mxu0 0.0
        %511 = vmatpush2.msra.mxu0 0.0
        %512 = vmatprep.subr.mxu0 0.0
        %513 = vmatpush2.msra.mxu0 0.0
        %514 = vmatprep.subr.mxu0 0.0
        %515 = vmatpush2.msra.mxu0 0.0
        %516 = vmatprep.mubr.f32.mxu0 0.0
        %517 = vmatmul.mubr.f32.gmra.mxu0 %v429
        %v518 = vpop.f32.mrf.mxu0
        %v519 = vadd.f32 0.0, %v518
        %v520 = vpop.f32.mrf.mxu0
        %521 = vmatprep.mubr.f32.mxu0 0.0
        %522 = vmatmul.mubr.f32.gmra.mxu0 %v432
        %v523 = vpop.f32.mrf.mxu0
        %v524 = vadd.f32 0.0, %v523
        %v525 = vpop.f32.mrf.mxu0
        %526 = vmatprep.mubr.f32.mxu0 0.0
        %527 = vmatmul.mubr.f32.gmra.mxu0 %v435
        %v528 = vpop.f32.mrf.mxu0
        %v529 = vadd.f32 0.0, %v528
        %v530 = vpop.f32.mrf.mxu0
        %531 = vmatprep.mubr.f32.mxu0 0.0
        %532 = vmatmul.mubr.f32.gmra.mxu0 %v438
        %v533 = vpop.f32.mrf.mxu0
        %v534 = vadd.f32 0.0, %v533
        %v535 = vpop.f32.mrf.mxu0
        %536 = vmatprep.mubr.f32.mxu0 0.0
        %537 = vmatmul.mubr.f32.gmra.mxu0 %v441
        %v538 = vpop.f32.mrf.mxu0
        %v539 = vadd.f32 0.0, %v538
        %v540 = vpop.f32.mrf.mxu0
        %541 = vmatprep.mubr.f32.mxu0 0.0
        %542 = vmatmul.mubr.f32.gmra.mxu0 %v444
        %v543 = vpop.f32.mrf.mxu0
        %v544 = vadd.f32 0.0, %v543
        %v545 = vpop.f32.mrf.mxu0
        %546 = vmatprep.mubr.f32.mxu0 0.0
        %547 = vmatmul.mubr.f32.gmra.mxu0 %v447
        %v548 = vpop.f32.mrf.mxu0
        %v549 = vadd.f32 0.0, %v548
        %v550 = vpop.f32.mrf.mxu0
        %551 = vmatprep.mubr.f32.mxu0 0.0
        %552 = vmatmul.mubr.f32.gmra.mxu0 %v450
        %v553 = vpop.f32.mrf.mxu0
        %v554 = vadd.f32 0.0, %v553
        %v555 = vpop.f32.mrf.mxu0
        %556 = vdwg.mxu0
        %558 = vset.pattern.permute.xlu0 0
        %559 = vperm.xlu0 %558, %v519
        %v560 = vpop.permute.xlu0 %559
        %563 = vset.pattern.permute.xlu0 0
        %564 = vperm.xlu0 %563, %v524
        %v565 = vpop.permute.xlu0 %564
        %568 = vset.pattern.permute.xlu0 0
        %569 = vperm.xlu0 %568, %v529
        %v570 = vpop.permute.xlu0 %569
        %573 = vset.pattern.permute.xlu0 0
        %574 = vperm.xlu0 %573, %v534
        %v575 = vpop.permute.xlu0 %574
        %578 = vset.pattern.permute.xlu0 0
        %579 = vperm.xlu0 %578, %v539
        %v580 = vpop.permute.xlu0 %579
        %583 = vset.pattern.permute.xlu0 0
        %584 = vperm.xlu0 %583, %v544
        %v585 = vpop.permute.xlu0 %584
        %588 = vset.pattern.permute.xlu0 0
        %589 = vperm.xlu0 %588, %v549
        %v590 = vpop.permute.xlu0 %589
        %593 = vset.pattern.permute.xlu0 0
        %594 = vperm.xlu0 %593, %v554
        %v595 = vpop.permute.xlu0 %594
        %v597 = vsub.f32 %v298, %v560
        %v598 = vsub.f32 %v299, %v560
        %v599 = vsub.f32 %v300, %v565
        %v600 = vsub.f32 %v301, %v565
        %v601 = vsub.f32 %v302, %v570
        %v602 = vsub.f32 %v303, %v570
        %v603 = vsub.f32 %v304, %v575
        %v604 = vsub.f32 %v305, %v575
        %v605 = vsub.f32 %v306, %v580
        %v606 = vsub.f32 %v307, %v580
        %v607 = vsub.f32 %v308, %v585
        %v608 = vsub.f32 %v309, %v585
        %v609 = vsub.f32 %v310, %v590
        %v610 = vsub.f32 %v311, %v590
        %v611 = vsub.f32 %v312, %v595
        %v612 = vsub.f32 %v313, %v595
        %v613 = vmul.f32 %v597, %v597
        %v614 = vmul.f32 %v598, %v598
        %v615 = vmul.f32 %v599, %v599
        %v616 = vmul.f32 %v600, %v600
        %v617 = vmul.f32 %v601, %v601
        %v618 = vmul.f32 %v602, %v602
        %v619 = vmul.f32 %v603, %v603
        %v620 = vmul.f32 %v604, %v604
        %v621 = vmul.f32 %v605, %v605
        %v622 = vmul.f32 %v606, %v606
        %v623 = vmul.f32 %v607, %v607
        %v624 = vmul.f32 %v608, %v608
        %v625 = vmul.f32 %v609, %v609
        %v626 = vmul.f32 %v610, %v610
        %v627 = vmul.f32 %v611, %v611
        %v628 = vmul.f32 %v612, %v612
        %629 = vmatprep.subr.mxu0 0.0
        %630 = vmatpush1.msra.mxu0 1.0
        %631 = vmatprep.subr.mxu0 0.0
        %632 = vmatpush1.msra.mxu0 1.0
        %633 = vmatprep.subr.mxu0 0.0
        %634 = vmatpush1.msra.mxu0 1.0
        %635 = vmatprep.subr.mxu0 0.0
        %636 = vmatpush1.msra.mxu0 1.0
        %637 = vmatprep.subr.mxu0 0.0
        %638 = vmatpush1.msra.mxu0 1.0
        %639 = vmatprep.subr.mxu0 0.0
        %640 = vmatpush1.msra.mxu0 1.0
        %641 = vmatprep.subr.mxu0 0.0
        %642 = vmatpush1.msra.mxu0 1.0
        %643 = vmatprep.subr.mxu0 0.0
        %644 = vmatpush1.msra.mxu0 1.0
        %645 = vmatprep.subr.mxu0 0.0
        %646 = vmatpush1.msra.mxu0 1.0
        %647 = vmatprep.subr.mxu0 0.0
        %648 = vmatpush1.msra.mxu0 1.0
        %649 = vmatprep.subr.mxu0 0.0
        %650 = vmatpush1.msra.mxu0 1.0
        %651 = vmatprep.subr.mxu0 0.0
        %652 = vmatpush1.msra.mxu0 1.0
        %653 = vmatprep.subr.mxu0 0.0
        %654 = vmatpush1.msra.mxu0 1.0
        %655 = vmatprep.subr.mxu0 0.0
        %656 = vmatpush1.msra.mxu0 1.0
        %657 = vmatprep.subr.mxu0 0.0
        %658 = vmatpush1.msra.mxu0 1.0
        %659 = vmatprep.subr.mxu0 0.0
        %660 = vmatpush1.msra.mxu0 1.0
        %661 = vmatprep.subr.mxu0 0.0
        %662 = vmatpush2.msra.mxu0 1.0
        %663 = vmatprep.subr.mxu0 0.0
        %664 = vmatpush2.msra.mxu0 1.0
        %665 = vmatprep.subr.mxu0 0.0
        %666 = vmatpush2.msra.mxu0 1.0
        %667 = vmatprep.subr.mxu0 0.0
        %668 = vmatpush2.msra.mxu0 1.0
        %669 = vmatprep.subr.mxu0 0.0
        %670 = vmatpush2.msra.mxu0 1.0
        %671 = vmatprep.subr.mxu0 0.0
        %672 = vmatpush2.msra.mxu0 1.0
        %673 = vmatprep.subr.mxu0 0.0
        %674 = vmatpush2.msra.mxu0 1.0
        %675 = vmatprep.subr.mxu0 0.0
        %676 = vmatpush2.msra.mxu0 1.0
        %677 = vmatprep.subr.mxu0 0.0
        %678 = vmatpush2.msra.mxu0 1.0
        %679 = vmatprep.subr.mxu0 0.0
        %680 = vmatpush2.msra.mxu0 1.0
        %681 = vmatprep.subr.mxu0 0.0
        %682 = vmatpush2.msra.mxu0 1.0
        %683 = vmatprep.subr.mxu0 0.0
        %684 = vmatpush2.msra.mxu0 1.0
        %685 = vmatprep.subr.mxu0 0.0
        %686 = vmatpush2.msra.mxu0 1.0
        %687 = vmatprep.subr.mxu0 0.0
        %688 = vmatpush2.msra.mxu0 1.0
        %689 = vmatprep.subr.mxu0 0.0
        %690 = vmatpush2.msra.mxu0 1.0
        %691 = vmatprep.subr.mxu0 0.0
        %692 = vmatpush2.msra.mxu0 1.0
        %693 = vmatprep.mubr.f32.mxu0 %v614
        %694 = vmatmul.mubr.f32.gmra.mxu0 %v613
        %v695 = vpop.f32.mrf.mxu0
        %v696 = vadd.f32 0.0, %v695
        %v697 = vpop.f32.mrf.mxu0
        %698 = vmatprep.mubr.f32.mxu0 %v616
        %699 = vmatmul.mubr.f32.gmra.mxu0 %v615
        %v700 = vpop.f32.mrf.mxu0
        %v701 = vadd.f32 0.0, %v700
        %v702 = vpop.f32.mrf.mxu0
        %703 = vmatprep.mubr.f32.mxu0 %v618
        %704 = vmatmul.mubr.f32.gmra.mxu0 %v617
        %v705 = vpop.f32.mrf.mxu0
        %v706 = vadd.f32 0.0, %v705
        %v707 = vpop.f32.mrf.mxu0
        %708 = vmatprep.mubr.f32.mxu0 %v620
        %709 = vmatmul.mubr.f32.gmra.mxu0 %v619
        %v710 = vpop.f32.mrf.mxu0
        %v711 = vadd.f32 0.0, %v710
        %v712 = vpop.f32.mrf.mxu0
        %713 = vmatprep.mubr.f32.mxu0 %v622
        %714 = vmatmul.mubr.f32.gmra.mxu0 %v621
        %v715 = vpop.f32.mrf.mxu0
        %v716 = vadd.f32 0.0, %v715
        %v717 = vpop.f32.mrf.mxu0
        %718 = vmatprep.mubr.f32.mxu0 %v624
        %719 = vmatmul.mubr.f32.gmra.mxu0 %v623
        %v720 = vpop.f32.mrf.mxu0
        %v721 = vadd.f32 0.0, %v720
        %v722 = vpop.f32.mrf.mxu0
        %723 = vmatprep.mubr.f32.mxu0 %v626
        %724 = vmatmul.mubr.f32.gmra.mxu0 %v625
        %v725 = vpop.f32.mrf.mxu0
        %v726 = vadd.f32 0.0, %v725
        %v727 = vpop.f32.mrf.mxu0
        %728 = vmatprep.mubr.f32.mxu0 %v628
        %729 = vmatmul.mubr.f32.gmra.mxu0 %v627
        %v730 = vpop.f32.mrf.mxu0
        %v731 = vadd.f32 0.0, %v730
        %v732 = vpop.f32.mrf.mxu0
        %733 = vdwg.mxu0
        %734 = vmatprep.subr.mxu0 0.0
        %735 = vmatpush1.msra.mxu0 0.0
        %736 = vmatprep.subr.mxu0 0.0
        %737 = vmatpush1.msra.mxu0 0.0
        %738 = vmatprep.subr.mxu0 0.0
        %739 = vmatpush1.msra.mxu0 0.0
        %740 = vmatprep.subr.mxu0 0.0
        %741 = vmatpush1.msra.mxu0 0.0
        %742 = vmatprep.subr.mxu0 0.0
        %743 = vmatpush1.msra.mxu0 0.0
        %744 = vmatprep.subr.mxu0 0.0
        %745 = vmatpush1.msra.mxu0 0.0
        %746 = vmatprep.subr.mxu0 0.0
        %747 = vmatpush1.msra.mxu0 0.0
        %748 = vmatprep.subr.mxu0 0.0
        %749 = vmatpush1.msra.mxu0 0.0
        %750 = vmatprep.subr.mxu0 0.0
        %751 = vmatpush1.msra.mxu0 %v731
        %752 = vmatprep.subr.mxu0 0.0
        %753 = vmatpush1.msra.mxu0 %v726
        %754 = vmatprep.subr.mxu0 0.0
        %755 = vmatpush1.msra.mxu0 %v721
        %756 = vmatprep.subr.mxu0 0.0
        %757 = vmatpush1.msra.mxu0 %v716
        %758 = vmatprep.subr.mxu0 0.0
        %759 = vmatpush1.msra.mxu0 %v711
        %760 = vmatprep.subr.mxu0 0.0
        %761 = vmatpush1.msra.mxu0 %v706
        %762 = vmatprep.subr.mxu0 0.0
        %763 = vmatpush1.msra.mxu0 %v701
        %764 = vmatprep.subr.mxu0 0.0
        %765 = vmatpush1.msra.mxu0 %v696
        %766 = vmatprep.subr.mxu0 0.0
        %767 = vmatpush2.msra.mxu0 0.0
        %768 = vmatprep.subr.mxu0 0.0
        %769 = vmatpush2.msra.mxu0 0.0
        %770 = vmatprep.subr.mxu0 0.0
        %771 = vmatpush2.msra.mxu0 0.0
        %772 = vmatprep.subr.mxu0 0.0
        %773 = vmatpush2.msra.mxu0 0.0
        %774 = vmatprep.subr.mxu0 0.0
        %775 = vmatpush2.msra.mxu0 0.0
        %776 = vmatprep.subr.mxu0 0.0
        %777 = vmatpush2.msra.mxu0 0.0
        %778 = vmatprep.subr.mxu0 0.0
        %779 = vmatpush2.msra.mxu0 0.0
        %780 = vmatprep.subr.mxu0 0.0
        %781 = vmatpush2.msra.mxu0 0.0
        %782 = vmatprep.subr.mxu0 0.0
        %783 = vmatpush2.msra.mxu0 0.0
        %784 = vmatprep.subr.mxu0 0.0
        %785 = vmatpush2.msra.mxu0 0.0
        %786 = vmatprep.subr.mxu0 0.0
        %787 = vmatpush2.msra.mxu0 0.0
        %788 = vmatprep.subr.mxu0 0.0
        %789 = vmatpush2.msra.mxu0 0.0
        %790 = vmatprep.subr.mxu0 0.0
        %791 = vmatpush2.msra.mxu0 0.0
        %792 = vmatprep.subr.mxu0 0.0
        %793 = vmatpush2.msra.mxu0 0.0
        %794 = vmatprep.subr.mxu0 0.0
        %795 = vmatpush2.msra.mxu0 0.0
        %796 = vmatprep.subr.mxu0 0.0
        %797 = vmatpush2.msra.mxu0 0.0
        %798 = vmatprep.mubr.f32.mxu0 0.0
        %799 = vmatmul.mubr.f32.gmra.mxu0 %v429
        %v800 = vpop.f32.mrf.mxu0
        %v801 = vadd.f32 1e-05, %v800
        %v802 = vpop.f32.mrf.mxu0
        %803 = vmatprep.mubr.f32.mxu0 0.0
        %804 = vmatmul.mubr.f32.gmra.mxu0 %v432
        %v805 = vpop.f32.mrf.mxu0
        %v806 = vadd.f32 1e-05, %v805
        %v807 = vpop.f32.mrf.mxu0
        %808 = vmatprep.mubr.f32.mxu0 0.0
        %809 = vmatmul.mubr.f32.gmra.mxu0 %v435
        %v810 = vpop.f32.mrf.mxu0
        %v811 = vadd.f32 1e-05, %v810
        %v812 = vpop.f32.mrf.mxu0
        %813 = vmatprep.mubr.f32.mxu0 0.0
        %814 = vmatmul.mubr.f32.gmra.mxu0 %v438
        %v815 = vpop.f32.mrf.mxu0
        %v816 = vadd.f32 1e-05, %v815
        %v817 = vpop.f32.mrf.mxu0
        %818 = vmatprep.mubr.f32.mxu0 0.0
        %819 = vmatmul.mubr.f32.gmra.mxu0 %v441
        %v820 = vpop.f32.mrf.mxu0
        %v821 = vadd.f32 1e-05, %v820
        %v822 = vpop.f32.mrf.mxu0
        %823 = vmatprep.mubr.f32.mxu0 0.0
        %824 = vmatmul.mubr.f32.gmra.mxu0 %v444
        %v825 = vpop.f32.mrf.mxu0
        %v826 = vadd.f32 1e-05, %v825
        %v827 = vpop.f32.mrf.mxu0
        %828 = vmatprep.mubr.f32.mxu0 0.0
        %829 = vmatmul.mubr.f32.gmra.mxu0 %v447
        %v830 = vpop.f32.mrf.mxu0
        %v831 = vadd.f32 1e-05, %v830
        %v832 = vpop.f32.mrf.mxu0
        %833 = vmatprep.mubr.f32.mxu0 0.0
        %834 = vmatmul.mubr.f32.gmra.mxu0 %v450
        %v835 = vpop.f32.mrf.mxu0
        %v836 = vadd.f32 1e-05, %v835
        %v837 = vpop.f32.mrf.mxu0
        %838 = vdwg.mxu0
        %v839 = vrsqrt.pop %v801
        %v840 = vrsqrt.pop %v806
        %v841 = vrsqrt.pop %v811
        %v842 = vrsqrt.pop %v816
        %v843 = vrsqrt.pop %v821
        %v844 = vrsqrt.pop %v826
        %v845 = vrsqrt.pop %v831
        %v846 = vrsqrt.pop %v836
        %v847 = vld [vmem:[%s1] sm:$0xff]
        %v848 = vld [vmem:[%s1 + $0x8] sm:$0xff]
        %v849 = vld [vmem:[%s1 + $0x10] sm:$0xff]
        %v850 = vld [vmem:[%s1 + $0x18] sm:$0xff]
        %v851 = vld [vmem:[%s1 + $0x20] sm:$0xff]
        %v852 = vld [vmem:[%s1 + $0x28] sm:$0xff]
        %v853 = vld [vmem:[%s1 + $0x30] sm:$0xff]
        %v854 = vld [vmem:[%s1 + $0x38] sm:$0xff]
        %v855 = vmul.f32 %v839, %v847
        %v856 = vmul.f32 %v840, %v848
        %v857 = vmul.f32 %v841, %v849
        %v858 = vmul.f32 %v842, %v850
        %v859 = vmul.f32 %v843, %v851
        %v860 = vmul.f32 %v844, %v852
        %v861 = vmul.f32 %v845, %v853
        %v862 = vmul.f32 %v846, %v854
        %864 = vset.pattern.permute.xlu0 0
        %865 = vperm.xlu0 %864, %v855
        %v866 = vpop.permute.xlu0 %865
        %869 = vset.pattern.permute.xlu0 0
        %870 = vperm.xlu0 %869, %v856
        %v871 = vpop.permute.xlu0 %870
        %874 = vset.pattern.permute.xlu0 0
        %875 = vperm.xlu0 %874, %v857
        %v876 = vpop.permute.xlu0 %875
        %879 = vset.pattern.permute.xlu0 0
        %880 = vperm.xlu0 %879, %v858
        %v881 = vpop.permute.xlu0 %880
        %884 = vset.pattern.permute.xlu0 0
        %885 = vperm.xlu0 %884, %v859
        %v886 = vpop.permute.xlu0 %885
        %889 = vset.pattern.permute.xlu0 0
        %890 = vperm.xlu0 %889, %v860
        %v891 = vpop.permute.xlu0 %890
        %894 = vset.pattern.permute.xlu0 0
        %895 = vperm.xlu0 %894, %v861
        %v896 = vpop.permute.xlu0 %895
        %899 = vset.pattern.permute.xlu0 0
        %900 = vperm.xlu0 %899, %v862
        %v901 = vpop.permute.xlu0 %900
        %v903 = vmul.f32 %v597, %v866
        %v904 = vmul.f32 %v598, %v866
        %v905 = vmul.f32 %v599, %v871
        %v906 = vmul.f32 %v600, %v871
        %v907 = vmul.f32 %v601, %v876
        %v908 = vmul.f32 %v602, %v876
        %v909 = vmul.f32 %v603, %v881
        %v910 = vmul.f32 %v604, %v881
        %v911 = vmul.f32 %v605, %v886
        %v912 = vmul.f32 %v606, %v886
        %v913 = vmul.f32 %v607, %v891
        %v914 = vmul.f32 %v608, %v891
        %v915 = vmul.f32 %v609, %v896
        %v916 = vmul.f32 %v610, %v896
        %v917 = vmul.f32 %v611, %v901
        %v918 = vmul.f32 %v612, %v901
        %v919 = vld [vmem:[%s2] sm:$0xff]
        %v920 = vld [vmem:[%s2 + $0x8] sm:$0xff]
        %v921 = vld [vmem:[%s2 + $0x10] sm:$0xff]
        %v922 = vld [vmem:[%s2 + $0x18] sm:$0xff]
        %v923 = vld [vmem:[%s2 + $0x20] sm:$0xff]
        %v924 = vld [vmem:[%s2 + $0x28] sm:$0xff]
        %v925 = vld [vmem:[%s2 + $0x30] sm:$0xff]
        %v926 = vld [vmem:[%s2 + $0x38] sm:$0xff]
        %928 = vset.pattern.permute.xlu0 0
        %929 = vperm.xlu0 %928, %v919
        %v930 = vpop.permute.xlu0 %929
        %933 = vset.pattern.permute.xlu0 0
        %934 = vperm.xlu0 %933, %v920
        %v935 = vpop.permute.xlu0 %934
        %938 = vset.pattern.permute.xlu0 0
        %939 = vperm.xlu0 %938, %v921
        %v940 = vpop.permute.xlu0 %939
        %943 = vset.pattern.permute.xlu0 0
        %944 = vperm.xlu0 %943, %v922
        %v945 = vpop.permute.xlu0 %944
        %948 = vset.pattern.permute.xlu0 0
        %949 = vperm.xlu0 %948, %v923
        %v950 = vpop.permute.xlu0 %949
        %953 = vset.pattern.permute.xlu0 0
        %954 = vperm.xlu0 %953, %v924
        %v955 = vpop.permute.xlu0 %954
        %958 = vset.pattern.permute.xlu0 0
        %959 = vperm.xlu0 %958, %v925
        %v960 = vpop.permute.xlu0 %959
        %963 = vset.pattern.permute.xlu0 0
        %964 = vperm.xlu0 %963, %v926
        %v965 = vpop.permute.xlu0 %964
        %v967 = vadd.f32 %v903, %v930
        %v968 = vadd.f32 %v904, %v930
        %v969 = vadd.f32 %v905, %v935
        %v970 = vadd.f32 %v906, %v935
        %v971 = vadd.f32 %v907, %v940
        %v972 = vadd.f32 %v908, %v940
        %v973 = vadd.f32 %v909, %v945
        %v974 = vadd.f32 %v910, %v945
        %v975 = vadd.f32 %v911, %v950
        %v976 = vadd.f32 %v912, %v950
        %v977 = vadd.f32 %v913, %v955
        %v978 = vadd.f32 %v914, %v955
        %v979 = vadd.f32 %v915, %v960
        %v980 = vadd.f32 %v916, %v960
        %v981 = vadd.f32 %v917, %v965
        %v982 = vadd.f32 %v918, %v965
        %v983 = vxor.u32 %v967, 2147483648
        %v984 = vxor.u32 %v968, 2147483648
        %v985 = vxor.u32 %v969, 2147483648
        %v986 = vxor.u32 %v970, 2147483648
        %v987 = vxor.u32 %v971, 2147483648
        %v988 = vxor.u32 %v972, 2147483648
        %v989 = vxor.u32 %v973, 2147483648
        %v990 = vxor.u32 %v974, 2147483648
        %v991 = vxor.u32 %v975, 2147483648
        %v992 = vxor.u32 %v976, 2147483648
        %v993 = vxor.u32 %v977, 2147483648
        %v994 = vxor.u32 %v978, 2147483648
        %v995 = vxor.u32 %v979, 2147483648
        %v996 = vxor.u32 %v980, 2147483648
        %v997 = vxor.u32 %v981, 2147483648
        %v998 = vxor.u32 %v982, 2147483648
        %v999 = vmul.f32 %v983, 1.442695
        %v1000 = vpow.pop %v999
        %v1001 = vmul.f32 %v984, 1.442695
        %v1002 = vpow.pop %v1001
        %v1003 = vmul.f32 %v985, 1.442695
        %v1004 = vpow.pop %v1003
        %v1005 = vmul.f32 %v986, 1.442695
        %v1006 = vpow.pop %v1005
        %v1007 = vmul.f32 %v987, 1.442695
        %v1008 = vpow.pop %v1007
        %v1009 = vmul.f32 %v988, 1.442695
        %v1010 = vpow.pop %v1009
        %v1011 = vmul.f32 %v989, 1.442695
        %v1012 = vpow.pop %v1011
        %v1013 = vmul.f32 %v990, 1.442695
        %v1014 = vpow.pop %v1013
        %v1015 = vmul.f32 %v991, 1.442695
        %v1016 = vpow.pop %v1015
        %v1017 = vmul.f32 %v992, 1.442695
        %v1018 = vpow.pop %v1017
        %v1019 = vmul.f32 %v993, 1.442695
        %v1020 = vpow.pop %v1019
        %v1021 = vmul.f32 %v994, 1.442695
        %v1022 = vpow.pop %v1021
        %v1023 = vmul.f32 %v995, 1.442695
        %v1024 = vpow.pop %v1023
        %v1025 = vmul.f32 %v996, 1.442695
        %v1026 = vpow.pop %v1025
        %v1027 = vmul.f32 %v997, 1.442695
        %v1028 = vpow.pop %v1027
        %v1029 = vmul.f32 %v998, 1.442695
        %v1030 = vpow.pop %v1029
        %v1031 = vadd.f32 %v1000, 1.0
        %v1032 = vadd.f32 %v1002, 1.0
        %v1033 = vadd.f32 %v1004, 1.0
        %v1034 = vadd.f32 %v1006, 1.0
        %v1035 = vadd.f32 %v1008, 1.0
        %v1036 = vadd.f32 %v1010, 1.0
        %v1037 = vadd.f32 %v1012, 1.0
        %v1038 = vadd.f32 %v1014, 1.0
        %v1039 = vadd.f32 %v1016, 1.0
        %v1040 = vadd.f32 %v1018, 1.0
        %v1041 = vadd.f32 %v1020, 1.0
        %v1042 = vadd.f32 %v1022, 1.0
        %v1043 = vadd.f32 %v1024, 1.0
        %v1044 = vadd.f32 %v1026, 1.0
        %v1045 = vadd.f32 %v1028, 1.0
        %v1046 = vadd.f32 %v1030, 1.0
        %v1047 = vrcp.pop %v1031
        %v1048 = vmul.f32 1.0, %v1047
        %v1049 = vrcp.pop %v1032
        %v1050 = vmul.f32 1.0, %v1049
        %v1051 = vrcp.pop %v1033
        %v1052 = vmul.f32 1.0, %v1051
        %v1053 = vrcp.pop %v1034
        %v1054 = vmul.f32 1.0, %v1053
        %v1055 = vrcp.pop %v1035
        %v1056 = vmul.f32 1.0, %v1055
        %v1057 = vrcp.pop %v1036
        %v1058 = vmul.f32 1.0, %v1057
        %v1059 = vrcp.pop %v1037
        %v1060 = vmul.f32 1.0, %v1059
        %v1061 = vrcp.pop %v1038
        %v1062 = vmul.f32 1.0, %v1061
        %v1063 = vrcp.pop %v1039
        %v1064 = vmul.f32 1.0, %v1063
        %v1065 = vrcp.pop %v1040
        %v1066 = vmul.f32 1.0, %v1065
        %v1067 = vrcp.pop %v1041
        %v1068 = vmul.f32 1.0, %v1067
        %v1069 = vrcp.pop %v1042
        %v1070 = vmul.f32 1.0, %v1069
        %v1071 = vrcp.pop %v1043
        %v1072 = vmul.f32 1.0, %v1071
        %v1073 = vrcp.pop %v1044
        %v1074 = vmul.f32 1.0, %v1073
        %v1075 = vrcp.pop %v1045
        %v1076 = vmul.f32 1.0, %v1075
        %v1077 = vrcp.pop %v1046
        %v1078 = vmul.f32 1.0, %v1077
        %v1079 = vmul.f32 %v967, %v1048
        %v1080 = vmul.f32 %v968, %v1050
        %v1081 = vmul.f32 %v969, %v1052
        %v1082 = vmul.f32 %v970, %v1054
        %v1083 = vmul.f32 %v971, %v1056
        %v1084 = vmul.f32 %v972, %v1058
        %v1085 = vmul.f32 %v973, %v1060
        %v1086 = vmul.f32 %v974, %v1062
        %v1087 = vmul.f32 %v975, %v1064
        %v1088 = vmul.f32 %v976, %v1066
        %v1089 = vmul.f32 %v977, %v1068
        %v1090 = vmul.f32 %v978, %v1070
        %v1091 = vmul.f32 %v979, %v1072
        %v1092 = vmul.f32 %v980, %v1074
        %v1093 = vmul.f32 %v981, %v1076
        %v1094 = vmul.f32 %v982, %v1078
        %v1095 = vpack.c.bf16 %v1081, %v1079
        %v1096 = vpack.c.bf16 %v1082, %v1080
        %v1097 = vpack.c.bf16 %v1085, %v1083
        %v1098 = vpack.c.bf16 %v1086, %v1084
        %v1099 = vpack.c.bf16 %v1089, %v1087
        %v1100 = vpack.c.bf16 %v1090, %v1088
        %v1101 = vpack.c.bf16 %v1093, %v1091
        %v1102 = vpack.c.bf16 %v1094, %v1092
        %v1103 = vld [vmem:[%s4] sm:$0xf]
        %v1104 = vld [vmem:[%s4 + $0x4] sm:$0xf]
        %v1105 = vld [vmem:[%s4 + $0x8] sm:$0xf]
        %v1106 = vld [vmem:[%s4 + $0xc] sm:$0xf]
        %v1107 = vld [vmem:[%s4 + $0x10] sm:$0x3]
        %v1113 = vunpack.c.l.b16 %v1103
        %v1114 = vunpack.c.l.b16 %v1104
        %v1115 = vunpack.c.l.b16 %v1105
        %v1116 = vunpack.c.l.b16 %v1106
        %v1117 = vunpack.c.l.b16 %v1107
        %v1118 = vpack.c.b16 %v1114, %v1113
        %v1119 = vpack.c.b16 %v1116, %v1115
        %v1120 = vpack.c.b16 %v1117, %v1117
        %v1122 = vsel %vm427, %v1118, 0
        %v1125 = vsel %vm427, %v1119, 0
        %v1128 = vsel %vm427, %v1120, 0
        %1130 = vmatprep.subr.bf16.mxu0 0
        %1131 = vmatpush1.bf16.msra.mxu0 0
        %1132 = vmatprep.subr.bf16.mxu0 0
        %1133 = vmatpush1.bf16.msra.mxu0 0
        %1134 = vmatprep.subr.bf16.mxu0 0
        %1135 = vmatpush1.bf16.msra.mxu0 0
        %1136 = vmatprep.subr.bf16.mxu0 0
        %1137 = vmatpush1.bf16.msra.mxu0 0
        %1138 = vmatprep.subr.bf16.mxu0 %v1102
        %1139 = vmatpush1.bf16.msra.mxu0 %v1101
        %1140 = vmatprep.subr.bf16.mxu0 %v1100
        %1141 = vmatpush1.bf16.msra.mxu0 %v1099
        %1142 = vmatprep.subr.bf16.mxu0 %v1098
        %1143 = vmatpush1.bf16.msra.mxu0 %v1097
        %1144 = vmatprep.subr.bf16.mxu0 %v1096
        %1145 = vmatpush1.bf16.msra.mxu0 %v1095
        %1146 = vmatprep.subr.bf16.mxu0 0
        %1147 = vmatpush2.bf16.msra.mxu0 0
        %1148 = vmatprep.subr.bf16.mxu0 0
        %1149 = vmatpush2.bf16.msra.mxu0 0
        %1150 = vmatprep.subr.bf16.mxu0 0
        %1151 = vmatpush2.bf16.msra.mxu0 0
        %1152 = vmatprep.subr.bf16.mxu0 0
        %1153 = vmatpush2.bf16.msra.mxu0 0
        %1154 = vmatprep.subr.bf16.mxu0 0
        %1155 = vmatpush2.bf16.msra.mxu0 0
        %1156 = vmatprep.subr.bf16.mxu0 0
        %1157 = vmatpush2.bf16.msra.mxu0 0
        %1158 = vmatprep.subr.bf16.mxu0 0
        %1159 = vmatpush2.bf16.msra.mxu0 0
        %1160 = vmatprep.subr.bf16.mxu0 0
        %1161 = vmatpush2.bf16.msra.mxu0 0
        %1162 = vmatprep.mubr.bf16.mxu0 0
        %1163 = vmatmul.mubr.bf16.gmra.mxu0 %v1122
        %v1164 = vpop.f32.mrf.mxu0
        %v1165 = vadd.f32 0.0, %v1164
        %v1166 = vpop.f32.mrf.mxu0
        %v1167 = vadd.f32 0.0, %v1166
        %v1168 = vpop.f32.mrf.mxu0
        %v1169 = vadd.f32 0.0, %v1168
        %v1170 = vpop.f32.mrf.mxu0
        %v1171 = vadd.f32 0.0, %v1170
        %1172 = vmatprep.mubr.bf16.mxu0 0
        %1173 = vmatmul.mubr.bf16.gmra.mxu0 %v1125
        %v1174 = vpop.f32.mrf.mxu0
        %v1175 = vadd.f32 0.0, %v1174
        %v1176 = vpop.f32.mrf.mxu0
        %v1177 = vadd.f32 0.0, %v1176
        %v1178 = vpop.f32.mrf.mxu0
        %v1179 = vadd.f32 0.0, %v1178
        %v1180 = vpop.f32.mrf.mxu0
        %v1181 = vadd.f32 0.0, %v1180
        %1182 = vmatprep.mubr.bf16.mxu0 0
        %1183 = vmatmul.mubr.bf16.gmra.mxu0 %v1128
        %v1184 = vpop.f32.mrf.mxu0
        %v1185 = vadd.f32 0.0, %v1184
        %v1186 = vpop.f32.mrf.mxu0
        %v1187 = vadd.f32 0.0, %v1186
        %v1188 = vpop.f32.mrf.mxu0
        %v1189 = vpop.f32.mrf.mxu0
        %1190 = vdwg.mxu0
        %1192 = vrot.lane.b32.xlu0 %v1167, 17
        %v1193 = vpop.permute.xlu0 %1192
        %1196 = vrot.lane.b32.xlu0 %v1165, 17
        %v1197 = vpop.permute.xlu0 %1196
        %vm1198 = vcmask 138240
        %v1199 = vsel %vm1198, %v1197, %v1193
        %v1202 = vsel %vm1198, %v1193, %v1197
        %v1203 = vld [vmem:[%s6] ss:$8 sm:$0x3]
        %v1205 = vlaneseq
        %v1206 = vshrl.u32 %v1205, 7
        %v1207 = vsub.s32 0, %v1206
        %v1208 = vrot.slane %v1203, %v1207
        %v1209 = vlaneseq
        %v1210 = vshrl.u32 %v1209, 7
        %v1211 = vsub.s32 1, %v1210
        %v1212 = vrot.slane %v1203, %v1211
        %v1215 = vmul.f32 %v1202, %v1208
        %v1216 = vmul.f32 %v1199, %v1212
        %v1217 = vadd.f32 %v1215, 0.0
        %v1218 = vadd.f32 %v1216, 0.0
        %1219 = vrot.lane.b32.xlu0 %v1167, 16
        %v1220 = vpop.permute.xlu0 %1219
        %1222 = vrot.lane.b32.xlu0 %v1165, 16
        %v1223 = vpop.permute.xlu0 %1222
        %vm1224 = vcmask 130048
        %v1225 = vsel %vm1224, %v1223, %v1220
        %v1228 = vsel %vm1224, %v1220, %v1223
        %s1229 = scalar_lea.vmem %s6, 1
        %v1230 = vld [vmem:[%s1229] ss:$8 sm:$0x3]
        %v1232 = vlaneseq
        %v1233 = vshrl.u32 %v1232, 7
        %v1234 = vsub.s32 0, %v1233
        %v1235 = vrot.slane %v1230, %v1234
        %v1236 = vlaneseq
        %v1237 = vshrl.u32 %v1236, 7
        %v1238 = vsub.s32 1, %v1237
        %v1239 = vrot.slane %v1230, %v1238
        %v1242 = vmul.f32 %v1228, %v1235
        %v1243 = vmul.f32 %v1225, %v1239
        %v1246 = vrot.slane %v1242, 4
        %v1247 = vrot.slane %v1243, 4
        %v1250 = vadd.f32 %v1217, %v1246
        %v1251 = vadd.f32 %v1218, %v1247
        %1253 = vrot.lane.b32.xlu0 %v1171, 15
        %v1254 = vpop.permute.xlu0 %1253
        %1257 = vrot.lane.b32.xlu0 %v1169, 15
        %v1258 = vpop.permute.xlu0 %1257
        %vm1259 = vcmask 121856
        %v1260 = vsel %vm1259, %v1258, %v1254
        %v1263 = vsel %vm1259, %v1254, %v1258
        %s1264 = scalar_lea.vmem %s6, 2
        %v1265 = vld [vmem:[%s1264] ss:$8 sm:$0x3]
        %v1267 = vlaneseq
        %v1268 = vshrl.u32 %v1267, 7
        %v1269 = vsub.s32 0, %v1268
        %v1270 = vrot.slane %v1265, %v1269
        %v1271 = vlaneseq
        %v1272 = vshrl.u32 %v1271, 7
        %v1273 = vsub.s32 1, %v1272
        %v1274 = vrot.slane %v1265, %v1273
        %v1277 = vmul.f32 %v1263, %v1270
        %v1278 = vmul.f32 %v1260, %v1274
        %v1279 = vadd.f32 %v1250, %v1277
        %v1280 = vadd.f32 %v1251, %v1278
        %1281 = vrot.lane.b32.xlu0 %v1171, 1
        %v1282 = vpop.permute.xlu0 %1281
        %1284 = vrot.lane.b32.xlu0 %v1169, 1
        %v1285 = vpop.permute.xlu0 %1284
        %vm1286 = vcmask 7168
        %v1287 = vsel %vm1286, %v1285, %v1282
        %v1290 = vsel %vm1286, %v1282, %v1285
        %s1291 = scalar_lea.vmem %s6, 3
        %v1292 = vld [vmem:[%s1291] ss:$8 sm:$0x3]
        %v1294 = vlaneseq
        %v1295 = vshrl.u32 %v1294, 7
        %v1296 = vsub.s32 0, %v1295
        %v1297 = vrot.slane %v1292, %v1296
        %v1298 = vlaneseq
        %v1299 = vshrl.u32 %v1298, 7
        %v1300 = vsub.s32 1, %v1299
        %v1301 = vrot.slane %v1292, %v1300
        %v1304 = vmul.f32 %v1290, %v1297
        %v1305 = vmul.f32 %v1287, %v1301
        %v1308 = vrot.slane %v1304, 4
        %v1309 = vrot.slane %v1305, 4
        %v1312 = vadd.f32 %v1279, %v1308
        %v1313 = vadd.f32 %v1280, %v1309
        %v1314 = vadd.f32 %v1312, %v1175
        %v1315 = vadd.f32 %v1313, %v1177
        %1318 = vrot.lane.b32.xlu0 %v1175, 127
        %v1319 = vpop.permute.xlu0 %1318
        %1320 = vrot.lane.b32.xlu0 %v1177, 127
        %v1321 = vpop.permute.xlu0 %1320
        %vm1322 = vcmask 1039360
        %v1323 = vsel %vm1322, %v1319, %v1321
        %v1327 = vsel %vm1322, %v1321, %v1319
        %s1328 = scalar_lea.vmem %s6, 5
        %v1329 = vld [vmem:[%s1328] ss:$8 sm:$0x3]
        %v1331 = vlaneseq
        %v1332 = vshrl.u32 %v1331, 7
        %v1333 = vsub.s32 0, %v1332
        %v1334 = vrot.slane %v1329, %v1333
        %v1335 = vlaneseq
        %v1336 = vshrl.u32 %v1335, 7
        %v1337 = vsub.s32 1, %v1336
        %v1338 = vrot.slane %v1329, %v1337
        %v1341 = vmul.f32 %v1323, %v1334
        %v1342 = vmul.f32 %v1327, %v1338
        %v1345 = vrot.slane %v1341, 4
        %v1346 = vrot.slane %v1342, 4
        %v1349 = vadd.f32 %v1314, %v1345
        %v1350 = vadd.f32 %v1315, %v1346
        %1353 = vrot.lane.b32.xlu0 %v1179, 113
        %v1354 = vpop.permute.xlu0 %1353
        %1355 = vrot.lane.b32.xlu0 %v1181, 113
        %v1356 = vpop.permute.xlu0 %1355
        %vm1357 = vcmask 924672
        %v1358 = vsel %vm1357, %v1354, %v1356
        %v1362 = vsel %vm1357, %v1356, %v1354
        %s1363 = scalar_lea.vmem %s6, 6
        %v1364 = vld [vmem:[%s1363] ss:$8 sm:$0x3]
        %v1366 = vlaneseq
        %v1367 = vshrl.u32 %v1366, 7
        %v1368 = vsub.s32 0, %v1367
        %v1369 = vrot.slane %v1364, %v1368
        %v1370 = vlaneseq
        %v1371 = vshrl.u32 %v1370, 7
        %v1372 = vsub.s32 1, %v1371
        %v1373 = vrot.slane %v1364, %v1372
        %v1376 = vmul.f32 %v1358, %v1369
        %v1377 = vmul.f32 %v1362, %v1373
        %v1378 = vadd.f32 %v1349, %v1376
        %v1379 = vadd.f32 %v1350, %v1377
        %1380 = vrot.lane.b32.xlu0 %v1179, 112
        %v1381 = vpop.permute.xlu0 %1380
        %1382 = vrot.lane.b32.xlu0 %v1181, 112
        %v1383 = vpop.permute.xlu0 %1382
        %vm1384 = vcmask 916480
        %v1385 = vsel %vm1384, %v1381, %v1383
        %v1389 = vsel %vm1384, %v1383, %v1381
        %s1390 = scalar_lea.vmem %s6, 7
        %v1391 = vld [vmem:[%s1390] ss:$8 sm:$0x3]
        %v1393 = vlaneseq
        %v1394 = vshrl.u32 %v1393, 7
        %v1395 = vsub.s32 0, %v1394
        %v1396 = vrot.slane %v1391, %v1395
        %v1397 = vlaneseq
        %v1398 = vshrl.u32 %v1397, 7
        %v1399 = vsub.s32 1, %v1398
        %v1400 = vrot.slane %v1391, %v1399
        %v1403 = vmul.f32 %v1385, %v1396
        %v1404 = vmul.f32 %v1389, %v1400
        %v1407 = vrot.slane %v1403, 4
        %v1408 = vrot.slane %v1404, 4
        %v1411 = vadd.f32 %v1378, %v1407
        %v1412 = vadd.f32 %v1379, %v1408
        %1415 = vrot.lane.b32.xlu0 %v1185, 111
        %v1416 = vpop.permute.xlu0 %1415
        %1417 = vrot.lane.b32.xlu0 %v1187, 111
        %v1418 = vpop.permute.xlu0 %1417
        %vm1419 = vcmask 908288
        %v1420 = vsel %vm1419, %v1416, %v1418
        %v1424 = vsel %vm1419, %v1418, %v1416
        %s1425 = scalar_lea.vmem %s6, 16
        %v1426 = vld [vmem:[%s1425] ss:$8 sm:$0x3]
        %v1428 = vlaneseq
        %v1429 = vshrl.u32 %v1428, 7
        %v1430 = vsub.s32 0, %v1429
        %v1431 = vrot.slane %v1426, %v1430
        %v1432 = vlaneseq
        %v1433 = vshrl.u32 %v1432, 7
        %v1434 = vsub.s32 1, %v1433
        %v1435 = vrot.slane %v1426, %v1434
        %v1438 = vmul.f32 %v1420, %v1431
        %v1439 = vmul.f32 %v1424, %v1435
        %v1440 = vadd.f32 %v1411, %v1438
        %v1441 = vadd.f32 %v1412, %v1439
        %v1442 = vld [vmem:[%s5] sm:$0xf]
        %1444 = vset.pattern.permute.xlu0 0
        %1445 = vperm.xlu0 %1444, %v1442
        %v1446 = vpop.permute.xlu0 %1445
        %v1448 = vadd.f32 %v1440, %v1446
        %v1449 = vadd.f32 %v1441, %v1446
        %v1452 = vcombine.low %v1448, %v1449
        %1454 = vst [vmem:[%s296] sm:$0xff] %v1452
        %s1455 = sand.u32 %s184, 1
        %s1456 = scalar_lea.sflag [#allocation4], %s1455
        %s1457 = sand.u32 %s184, 1
        %s1458 = smul.addr %s1457, 8
        %s1459 = scalar_lea.vmem [#allocation5], %s1458
        // Predicated region
        $region53: #{tpu_custom_call.1} parent=47 // pred_check
          %p1460 = pneg %p194
        $region54: #{tpu_custom_call.1} parent=47 // pred_check_branch
          %1462 = sbr.rel (%p1460) target = $region56
        $region55: #{tpu_custom_call.1} parent=47 // pred_region
          %s1464 = ssub.s32 128, 128
          %1465 = vsyncadd %s1456, %s1464
          %s1466 = smul.addr %s24, 2
          %s1467 = smul.addr %s1466, 64
          %s1468 = scalar_lea.hbm %s7, %s1467
          %s1470 = sshll.u32 %s1459, 4
          %s1471 = int_to_ptr.vmem [resolvable:$true] %s1470
          %1473 = dma.vmem_to_hbm [thread:$0]  %s1471, 128, %s1468, %s1456
        $region56: #{tpu_custom_call.1} parent=47 // pred_fallthru
          _
      $region48: #{tpu_custom_call.1} parent=5 // pred_fallthru
        _
      %p1474 = scmp.le.s32.totalorder 2, %s19
      // Predicated region
      $region57: #{tpu_custom_call.1} parent=5 // pred_check
        %p1475 = pneg %p1474
      $region58: #{tpu_custom_call.1} parent=5 // pred_check_branch
        %1477 = sbr.rel (%p1475) target = $region60
      $region59: #{tpu_custom_call.1} parent=5 // pred_region
        %s1478 = ssub.s32 %s19, 2
        // Predicated region
        $region61: #{tpu_custom_call.1} parent=59 // pred_check
          %p1479 = pneg %p200
        $region62: #{tpu_custom_call.1} parent=59 // pred_check_branch
          %1481 = sbr.rel (%p1479) target = $region64
        $region63: #{tpu_custom_call.1} parent=59 // pred_region
          %s1482 = sand.u32 %s185, 1
          %s1483 = scalar_lea.sflag [#allocation4], %s1482
          %s1484 = sand.u32 %s185, 1
          %s1485 = smul.addr %s1484, 8
          %s1486 = scalar_lea.vmem [#allocation5], %s1485
          %1487 = dma.done %s1483, 128
        $region64: #{tpu_custom_call.1} parent=59 // pred_fallthru
          _
      $region60: #{tpu_custom_call.1} parent=5 // pred_fallthru
        _
    $region6: #{tpu_custom_call.1} parent=1 // loop_footer
      %s23 = sadd.s32 1, %s19
    $region7: #{tpu_custom_call.1} parent=1 // loop_footer_branch
      %18 = sbr.rel target = $region3
    $region8: #{tpu_custom_call.1} parent=1 // loop_exit
      _
    %1488 = vsyncpa [#allocation3], 1
    %s1489 = scalar_lea.sflag [#allocation3], 1
    %1490 = vsyncpa %s1489, 1
    %1491 = vsyncpa [#allocation4], 1
    %s1492 = scalar_lea.sflag [#allocation4], 1
    %1493 = vsyncpa %s1492, 1

</llo_original>
